<compile_context>
chip_gen: v7x
topology: tpu7x:2x2x1
jax: 0.10.0
libtpu: 0.0.40
codegen_flags: <defaults>
</compile_context>

<pallas_src>
import functools

import jax
import jax.numpy as jnp
from jax.experimental import pallas as pl
from jax.experimental.pallas import tpu as pltpu

EPS = 1e-5                      # layer_norm_eps
VMEM_LIMIT = 32 * 1024 * 1024   # >= default scoped limit on v5e/v6e/v7x


def _gelu(x):
    # exact (erf-based) GELU, matching HF ACT2FN["gelu"] / torch GELU default
    return 0.5 * x * (1.0 + jax.lax.erf(x / jnp.sqrt(2.0).astype(x.dtype)))


def _layernorm(y, gamma, beta):
    mu = jnp.mean(y, axis=-1, keepdims=True)
    var = jnp.mean(jnp.square(y - mu), axis=-1, keepdims=True)
    return (y - mu) * jax.lax.rsqrt(var + EPS) * gamma + beta


def _cparams():
    return pltpu.CompilerParams(
        dimension_semantics=("parallel",),
        vmem_limit_bytes=VMEM_LIMIT,
    )


# ----------------------------- Pallas kernels -----------------------------

def _attn_block_kernel(x_ref, wqkv_ref, bqkv_ref, wo_ref, bo_ref,
                       g_ref, beta_ref, o_ref, *, num_heads):
    """Fused QKV proj + MHA + out-proj + residual + LayerNorm1 for one batch elem.

    wqkv_ref: (3*nh, H, hd) bf16, per-head slabs stacked [q..., k..., v...];
              the head_dim**-0.5 scaling is folded into the q slabs/biases.
    wo_ref:   (nh, hd, H) bf16; out-projection decomposed per head so the head
              contexts never need lane slicing / concatenation / transposes.
    """
    x = x_ref[0]                                           # (T, H) f32
    xb = x.astype(jnp.bfloat16)
    acc = jnp.zeros(x.shape, jnp.float32)
    for h in range(num_heads):
        q = jnp.dot(xb, wqkv_ref[h],
                    preferred_element_type=jnp.float32) + bqkv_ref[h]
        k = jnp.dot(xb, wqkv_ref[num_heads + h],
                    preferred_element_type=jnp.float32) + bqkv_ref[num_heads + h]
        v = jnp.dot(xb, wqkv_ref[2 * num_heads + h],
                    preferred_element_type=jnp.float32) + bqkv_ref[2 * num_heads + h]
        s = jax.lax.dot_general(q.astype(jnp.bfloat16), k.astype(jnp.bfloat16),
                                (((1,), (1,)), ((), ())),
                                preferred_element_type=jnp.float32)    # (T, T)
        s = s - jnp.max(s, axis=-1, keepdims=True)
        e = jnp.exp(s)
        p = e * pl.reciprocal(jnp.sum(e, axis=-1, keepdims=True), approx=True)
        ctx = jnp.dot(p.astype(jnp.bfloat16), v.astype(jnp.bfloat16),
                      preferred_element_type=jnp.float32)              # (T, hd)
        acc = acc + jnp.dot(ctx.astype(jnp.bfloat16), wo_ref[h],
                            preferred_element_type=jnp.float32)        # (T, H)
    y = x + acc + bo_ref[...]
    o_ref[0] = _layernorm(y, g_ref[...], beta_ref[...])


def _ffn_block_kernel(x_ref, w1_ref, b1_ref, w2_ref, b2_ref, g_ref, beta_ref, o_ref):
    """Fused FFN (dense -> gelu -> dense) + residual + LayerNorm2 for one row tile."""
    x = x_ref[...]                                         # (tm, H) f32
    h = jnp.dot(x.astype(jnp.bfloat16), w1_ref[...],
                preferred_element_type=jnp.float32) + b1_ref[...]
    h = _gelu(h)
    f = jnp.dot(h.astype(jnp.bfloat16), w2_ref[...],
                preferred_element_type=jnp.float32) + b2_ref[...]
    o_ref[...] = _layernorm(x + f, g_ref[...], beta_ref[...])


def _posconv_ln_kernel(xg_ref, w_ref, b_ref, g_ref, beta_ref, o_ref,
                       *, kernel_size, pad, groups):
    """Grouped positional conv + gelu + residual add + encoder LayerNorm.

    xg_ref: (1, G, T, Cg) group-major view of one batch element.
    w_ref:  (G, K, Cg, Cg) bf16 per-group per-tap matmul weights.
    Halo handling: per tap, pltpu.roll the resident (T, Cg) tile along time and
    zero the wrapped rows with an iota mask (no host padding, no unaligned
    sublane slices).  Only the first T of the T+1 conv outputs are produced,
    matching DeBCISamePadLayer for an even kernel size.
    """
    T, Cg = xg_ref.shape[2], xg_ref.shape[3]
    row = jax.lax.broadcasted_iota(jnp.int32, (T, Cg), 0)
    x_parts, pos_parts = [], []
    for g in range(groups):
        xg = xg_ref[0, g]                                  # (T, Cg) f32
        x_parts.append(xg)
        acc = jnp.zeros((T, Cg), jnp.float32)
        for k in range(kernel_size):
            s = k - pad                                    # tap offset in time
            shift = (-s) % T
            shifted = xg if shift == 0 else pltpu.roll(xg, shift, 0)
            valid = jnp.logical_and(row + s >= 0, row + s < T)
            tap = jnp.where(valid, shifted, 0.0)
            acc = acc + jnp.dot(tap.astype(jnp.bfloat16), w_ref[g, k],
                                preferred_element_type=jnp.float32)
        pos_parts.append(_gelu(acc + b_ref[g]))            # feat_extract_activation
    x = jnp.concatenate(x_parts, axis=-1)                  # (T, H) original hidden
    pos = jnp.concatenate(pos_parts, axis=-1)              # (T, H) positional embed
    o_ref[0] = _layernorm(x + pos, g_ref[...], beta_ref[...])


# ----------------------------- wrappers -----------------------------------

def pallas_attention_block(x, lp, num_heads):
    B, T, H = x.shape
    nh = num_heads
    hd = H // nh
    kern = functools.partial(_attn_block_kernel, num_heads=nh)
    return pl.pallas_call(
        kern,
        out_shape=jax.ShapeDtypeStruct((B, T, H), jnp.float32),
        grid=(B,),
        in_specs=[
            pl.BlockSpec((1, T, H), lambda b: (b, 0, 0)),
            pl.BlockSpec((3 * nh, H, hd), lambda b: (0, 0, 0)),
            pl.BlockSpec((3 * nh, 1, hd), lambda b: (0, 0, 0)),
            pl.BlockSpec((nh, hd, H), lambda b: (0, 0, 0)),
            pl.BlockSpec((1, H), lambda b: (0, 0)),
            pl.BlockSpec((1, H), lambda b: (0, 0)),
            pl.BlockSpec((1, H), lambda b: (0, 0)),
        ],
        out_specs=pl.BlockSpec((1, T, H), lambda b: (b, 0, 0)),
        compiler_params=_cparams(),
    )(x, lp["wqkv_h"], lp["bqkv_h"], lp["wo_h"], lp["bo"], lp["ln1_g"], lp["ln1_b"])


def _row_tile(M, target=256):
    # Largest multiple-of-8 tile <= target that evenly divides M; degenerates to
    # the full array for small M (keeps block shapes (8,128)-legal in all cases).
    if M <= target:
        return M
    t = target
    while t >= 8 and M % t != 0:
        t -= 8
    return t if t >= 8 and M % t == 0 else M


def pallas_ffn_block(x2d, lp):
    M, H = x2d.shape
    I = lp["w1"].shape[1]
    tm = _row_tile(M)
    return pl.pallas_call(
        _ffn_block_kernel,
        out_shape=jax.ShapeDtypeStruct((M, H), jnp.float32),
        grid=(M // tm,),
        in_specs=[
            pl.BlockSpec((tm, H), lambda i: (i, 0)),
            pl.BlockSpec((H, I), lambda i: (0, 0)),
            pl.BlockSpec((1, I), lambda i: (0, 0)),
            pl.BlockSpec((I, H), lambda i: (0, 0)),
            pl.BlockSpec((1, H), lambda i: (0, 0)),
            pl.BlockSpec((1, H), lambda i: (0, 0)),
            pl.BlockSpec((1, H), lambda i: (0, 0)),
        ],
        out_specs=pl.BlockSpec((tm, H), lambda i: (i, 0)),
        compiler_params=_cparams(),
    )(x2d, lp["w1"], lp["b1"], lp["w2"], lp["b2"], lp["ln2_g"], lp["ln2_b"])


def pallas_posconv_add_ln(xg, w_grouped, b_grouped, ln_g, ln_b, kernel_size):
    B, G, T, Cg = xg.shape
    H = G * Cg
    K = kernel_size
    kern = functools.partial(_posconv_ln_kernel, kernel_size=K, pad=K // 2, groups=G)
    return pl.pallas_call(
        kern,
        out_shape=jax.ShapeDtypeStruct((B, T, H), jnp.float32),
        grid=(B,),
        in_specs=[
            pl.BlockSpec((1, G, T, Cg), lambda b: (b, 0, 0, 0)),
            pl.BlockSpec((G, K, Cg, Cg), lambda b: (0, 0, 0, 0)),
            pl.BlockSpec((G, 1, Cg), lambda b: (0, 0, 0)),
            pl.BlockSpec((1, H), lambda b: (0, 0)),
            pl.BlockSpec((1, H), lambda b: (0, 0)),
        ],
        out_specs=pl.BlockSpec((1, T, H), lambda b: (b, 0, 0)),
        compiler_params=_cparams(),
    )(xg, w_grouped, b_grouped, ln_g, ln_b)


# ----------------------------- model forward -------------------------------

def debci_encoder_forward(hidden_states, params):
    # attention_mask is None -> no masking branch; dropout/layerdrop: identity.
    B, T, H = hidden_states.shape
    G = params["conv_groups"]
    Cg = H // G
    # group-major view of the input for the grouped positional conv
    xg = hidden_states.reshape(B, T, G, Cg).transpose(0, 2, 1, 3)   # (B, G, T, Cg)
    x = pallas_posconv_add_ln(xg, params["conv_w"], params["conv_b"],
                              params["enc_ln_g"], params["enc_ln_b"],
                              params["conv_k"])
    for lp in params["layers"]:
        x = pallas_attention_block(x, lp, params["num_heads"])
        x = pallas_ffn_block(x.reshape(B * T, H), lp).reshape(B, T, H)
    return x  # BaseModelOutput.last_hidden_state


# ----------------------------- parameter init ------------------------------

def build_params(key, H, num_heads, intermediate, num_layers, conv_k, conv_groups):
    scale = 0.05
    nh, hd = num_heads, H // num_heads
    G, Cg = conv_groups, H // conv_groups
    keys = jax.random.split(key, 2 + num_layers)

    # grouped positional conv, torch layout (out_channels=H, in_channels/groups=Cg, K)
    w_conv = jax.random.normal(keys[0], (H, Cg, conv_k), jnp.float32) * scale
    conv_b = jax.random.normal(keys[1], (H,), jnp.float32) * scale
    # per-group matmul form: w_grouped[g, k, ci, co] = w_conv[g*Cg + co, ci, k]
    w_grouped = jnp.transpose(w_conv.reshape(G, Cg, Cg, conv_k), (0, 3, 2, 1))
    # NOTE: weight_norm at init reproduces the raw weight, so using the raw
    # weight matches the PyTorch forward exactly.

    def col_heads(w):   # (H, H) -> (nh, H, hd): per-head output-column slabs
        return jnp.transpose(w.reshape(H, nh, hd), (1, 0, 2))

    layers = []
    for li in range(num_layers):
        lk = jax.random.split(keys[2 + li], 12)
        scaling = hd ** -0.5   # folded into q weight/bias (torch: q_proj(x)*scaling)
        wq = jax.random.normal(lk[0], (H, H), jnp.float32) * scale * scaling
        bq = jax.random.normal(lk[1], (H,), jnp.float32) * scale * scaling
        wk = jax.random.normal(lk[2], (H, H), jnp.float32) * scale
        bk = jax.random.normal(lk[3], (H,), jnp.float32) * scale
        wv = jax.random.normal(lk[4], (H, H), jnp.float32) * scale
        bv = jax.random.normal(lk[5], (H,), jnp.float32) * scale
        wo = jax.random.normal(lk[6], (H, H), jnp.float32) * scale
        bo = jax.random.normal(lk[7], (H,), jnp.float32) * scale
        layers.append(dict(
            wqkv_h=jnp.concatenate(
                [col_heads(wq), col_heads(wk), col_heads(wv)], axis=0
            ).astype(jnp.bfloat16),                                    # (3nh, H, hd)
            bqkv_h=jnp.concatenate(
                [bq.reshape(nh, 1, hd), bk.reshape(nh, 1, hd), bv.reshape(nh, 1, hd)],
                axis=0),                                               # (3nh, 1, hd) f32
            wo_h=wo.reshape(nh, hd, H).astype(jnp.bfloat16),           # (nh, hd, H)
            bo=bo.reshape(1, H),
            ln1_g=jnp.ones((1, H), jnp.float32),
            ln1_b=jnp.zeros((1, H), jnp.float32),
            w1=(jax.random.normal(lk[8], (H, intermediate), jnp.float32) * scale
                ).astype(jnp.bfloat16),
            b1=(jax.random.normal(lk[9], (intermediate,), jnp.float32) * scale
                ).reshape(1, intermediate),
            w2=(jax.random.normal(lk[10], (intermediate, H), jnp.float32) * scale
                ).astype(jnp.bfloat16),
            b2=(jax.random.normal(lk[11], (H,), jnp.float32) * scale).reshape(1, H),
            ln2_g=jnp.ones((1, H), jnp.float32),
            ln2_b=jnp.zeros((1, H), jnp.float32),
        ))

    return dict(
        conv_w=w_grouped.astype(jnp.bfloat16),
        conv_b=conv_b.reshape(G, 1, Cg),
        conv_k=conv_k,
        conv_groups=conv_groups,
        enc_ln_g=jnp.ones((1, H), jnp.float32),
        enc_ln_b=jnp.zeros((1, H), jnp.float32),
        num_heads=num_heads,
        layers=layers,
    )


if __name__ == "__main__":
    # small config: hidden_size=32, num_attention_heads=4, intermediate_size=64,
    # num_hidden_layers=2, num_conv_pos_embeddings=8, num_conv_pos_embedding_groups=2
    B, T, H = 2, 16, 32
    NUM_HEADS, INTER, LAYERS, CONV_K, CONV_G = 4, 64, 2, 8, 2

    root = jax.random.PRNGKey(0)
    k_params, k_x = jax.random.split(root)
    params = build_params(k_params, H, NUM_HEADS, INTER, LAYERS, CONV_K, CONV_G)
    x = jax.random.normal(k_x, (B, T, H), jnp.float32)

    out = debci_encoder_forward(x, params)
    jax.block_until_ready(out)
    assert out.shape == (B, T, H)
    assert bool(jnp.all(jnp.isfinite(out)))
    print("KERNEL_OK")
</pallas_src>

<mosaic_0001>
module attributes {stable_mosaic.version = 11 : i64} {
  func.func @_posconv_ln_kernel(%arg0: i32, %arg1: memref<1x2x16x16xf32, #tpu.memory_space<vmem>>, %arg2: memref<2x8x16x16xbf16, #tpu.memory_space<vmem>>, %arg3: memref<2x1x16xf32, #tpu.memory_space<vmem>>, %arg4: memref<1x32xf32, #tpu.memory_space<vmem>>, %arg5: memref<1x32xf32, #tpu.memory_space<vmem>>, %arg6: memref<1x16x32xf32, #tpu.memory_space<vmem>>) attributes {dimension_semantics = [#tpu.dimension_semantics<parallel>], iteration_bounds = array<i64: 2>, scalar_prefetch = 0 : i64, scratch_operands = 0 : i64, tpu.core_type = #tpu.core_type<tc>, window_params = [{transform_indices = @transform_0, window_bounds = array<i64: 1, 2, 16, 16>}, {pipeline_mode = #tpu.pipeline_mode<synchronous>, transform_indices = @transform_1, window_bounds = array<i64: 2, 8, 16, 16>}, {pipeline_mode = #tpu.pipeline_mode<synchronous>, transform_indices = @transform_2, window_bounds = array<i64: 2, 1, 16>}, {pipeline_mode = #tpu.pipeline_mode<synchronous>, transform_indices = @transform_3, window_bounds = array<i64: 1, 32>}, {pipeline_mode = #tpu.pipeline_mode<synchronous>, transform_indices = @transform_4, window_bounds = array<i64: 1, 32>}, {transform_indices = @transform_5, window_bounds = array<i64: 1, 16, 32>}]} {
    %0 = tpu.iota {dimensions = array<i32: 0>} : vector<16x16xi32>
    %c0 = arith.constant 0 : index
    %c0_0 = arith.constant 0 : index
    %c0_1 = arith.constant 0 : index
    %c0_2 = arith.constant 0 : index
    %1 = vector.load %arg1[%c0, %c0_0, %c0_1, %c0_2] : memref<1x2x16x16xf32, #tpu.memory_space<vmem>>, vector<1x1x16x16xf32>
    %2 = vector.shape_cast %1 : vector<1x1x16x16xf32> to vector<16x16xf32>
    %cst = arith.constant 0.000000e+00 : f32
    %3 = vector.broadcast %cst : f32 to vector<16x16xf32>
    %c4_i32 = arith.constant 4 : i32
    %4 = tpu.dynamic_rotate %2 by %c4_i32 dim 0 : vector<16x16xf32>, i32 -> vector<16x16xf32>
    %c-4_i32 = arith.constant -4 : i32
    %5 = vector.broadcast %c-4_i32 : i32 to vector<16x16xi32>
    %6 = arith.addi %0, %5 : vector<16x16xi32>
    %c0_i32 = arith.constant 0 : i32
    %7 = vector.broadcast %c0_i32 : i32 to vector<16x16xi32>
    %8 = arith.cmpi sge, %6, %7 : vector<16x16xi32>
    %c-4_i32_3 = arith.constant -4 : i32
    %9 = vector.broadcast %c-4_i32_3 : i32 to vector<16x16xi32>
    %10 = arith.addi %0, %9 : vector<16x16xi32>
    %c16_i32 = arith.constant 16 : i32
    %11 = vector.broadcast %c16_i32 : i32 to vector<16x16xi32>
    %12 = arith.cmpi slt, %10, %11 : vector<16x16xi32>
    %13 = arith.andi %8, %12 : vector<16x16xi1>
    %cst_4 = arith.constant 0.000000e+00 : f32
    %14 = vector.broadcast %cst_4 : f32 to vector<16x16xf32>
    %15 = arith.select %13, %4, %14 : vector<16x16xi1>, vector<16x16xf32>
    %16 = arith.truncf %15 : vector<16x16xf32> to vector<16x16xbf16>
    %c0_5 = arith.constant 0 : index
    %c0_6 = arith.constant 0 : index
    %c0_7 = arith.constant 0 : index
    %c0_8 = arith.constant 0 : index
    %17 = vector.load %arg2[%c0_5, %c0_6, %c0_7, %c0_8] : memref<2x8x16x16xbf16, #tpu.memory_space<vmem>>, vector<1x1x16x16xbf16>
    %18 = vector.shape_cast %17 : vector<1x1x16x16xbf16> to vector<16x16xbf16>
    %cst_9 = arith.constant dense<0.000000e+00> : vector<16x16xf32>
    %19 = tpu.matmul %16, %18, %cst_9 {dimension_numbers = #tpu.dot_dimension_numbers<[1], [0], [0], [1], [0, 0, 1, 1], [], []>} : vector<16x16xbf16>, vector<16x16xbf16>, vector<16x16xf32> -> vector<16x16xf32>
    %20 = arith.addf %3, %19 : vector<16x16xf32>
    %c3_i32 = arith.constant 3 : i32
    %21 = tpu.dynamic_rotate %2 by %c3_i32 dim 0 : vector<16x16xf32>, i32 -> vector<16x16xf32>
    %c-3_i32 = arith.constant -3 : i32
    %22 = vector.broadcast %c-3_i32 : i32 to vector<16x16xi32>
    %23 = arith.addi %0, %22 : vector<16x16xi32>
    %c0_i32_10 = arith.constant 0 : i32
    %24 = vector.broadcast %c0_i32_10 : i32 to vector<16x16xi32>
    %25 = arith.cmpi sge, %23, %24 : vector<16x16xi32>
    %c-3_i32_11 = arith.constant -3 : i32
    %26 = vector.broadcast %c-3_i32_11 : i32 to vector<16x16xi32>
    %27 = arith.addi %0, %26 : vector<16x16xi32>
    %c16_i32_12 = arith.constant 16 : i32
    %28 = vector.broadcast %c16_i32_12 : i32 to vector<16x16xi32>
    %29 = arith.cmpi slt, %27, %28 : vector<16x16xi32>
    %30 = arith.andi %25, %29 : vector<16x16xi1>
    %cst_13 = arith.constant 0.000000e+00 : f32
    %31 = vector.broadcast %cst_13 : f32 to vector<16x16xf32>
    %32 = arith.select %30, %21, %31 : vector<16x16xi1>, vector<16x16xf32>
    %33 = arith.truncf %32 : vector<16x16xf32> to vector<16x16xbf16>
    %c0_14 = arith.constant 0 : index
    %c1 = arith.constant 1 : index
    %c0_15 = arith.constant 0 : index
    %c0_16 = arith.constant 0 : index
    %34 = vector.load %arg2[%c0_14, %c1, %c0_15, %c0_16] : memref<2x8x16x16xbf16, #tpu.memory_space<vmem>>, vector<1x1x16x16xbf16>
    %35 = vector.shape_cast %34 : vector<1x1x16x16xbf16> to vector<16x16xbf16>
    %cst_17 = arith.constant dense<0.000000e+00> : vector<16x16xf32>
    %36 = tpu.matmul %33, %35, %cst_17 {dimension_numbers = #tpu.dot_dimension_numbers<[1], [0], [0], [1], [0, 0, 1, 1], [], []>} : vector<16x16xbf16>, vector<16x16xbf16>, vector<16x16xf32> -> vector<16x16xf32>
    %37 = arith.addf %20, %36 : vector<16x16xf32>
    %c2_i32 = arith.constant 2 : i32
    %38 = tpu.dynamic_rotate %2 by %c2_i32 dim 0 : vector<16x16xf32>, i32 -> vector<16x16xf32>
    %c-2_i32 = arith.constant -2 : i32
    %39 = vector.broadcast %c-2_i32 : i32 to vector<16x16xi32>
    %40 = arith.addi %0, %39 : vector<16x16xi32>
    %c0_i32_18 = arith.constant 0 : i32
    %41 = vector.broadcast %c0_i32_18 : i32 to vector<16x16xi32>
    %42 = arith.cmpi sge, %40, %41 : vector<16x16xi32>
    %c-2_i32_19 = arith.constant -2 : i32
    %43 = vector.broadcast %c-2_i32_19 : i32 to vector<16x16xi32>
    %44 = arith.addi %0, %43 : vector<16x16xi32>
    %c16_i32_20 = arith.constant 16 : i32
    %45 = vector.broadcast %c16_i32_20 : i32 to vector<16x16xi32>
    %46 = arith.cmpi slt, %44, %45 : vector<16x16xi32>
    %47 = arith.andi %42, %46 : vector<16x16xi1>
    %cst_21 = arith.constant 0.000000e+00 : f32
    %48 = vector.broadcast %cst_21 : f32 to vector<16x16xf32>
    %49 = arith.select %47, %38, %48 : vector<16x16xi1>, vector<16x16xf32>
    %50 = arith.truncf %49 : vector<16x16xf32> to vector<16x16xbf16>
    %c0_22 = arith.constant 0 : index
    %c2 = arith.constant 2 : index
    %c0_23 = arith.constant 0 : index
    %c0_24 = arith.constant 0 : index
    %51 = vector.load %arg2[%c0_22, %c2, %c0_23, %c0_24] : memref<2x8x16x16xbf16, #tpu.memory_space<vmem>>, vector<1x1x16x16xbf16>
    %52 = vector.shape_cast %51 : vector<1x1x16x16xbf16> to vector<16x16xbf16>
    %cst_25 = arith.constant dense<0.000000e+00> : vector<16x16xf32>
    %53 = tpu.matmul %50, %52, %cst_25 {dimension_numbers = #tpu.dot_dimension_numbers<[1], [0], [0], [1], [0, 0, 1, 1], [], []>} : vector<16x16xbf16>, vector<16x16xbf16>, vector<16x16xf32> -> vector<16x16xf32>
    %54 = arith.addf %37, %53 : vector<16x16xf32>
    %c1_i32 = arith.constant 1 : i32
    %55 = tpu.dynamic_rotate %2 by %c1_i32 dim 0 : vector<16x16xf32>, i32 -> vector<16x16xf32>
    %c-1_i32 = arith.constant -1 : i32
    %56 = vector.broadcast %c-1_i32 : i32 to vector<16x16xi32>
    %57 = arith.addi %0, %56 : vector<16x16xi32>
    %c0_i32_26 = arith.constant 0 : i32
    %58 = vector.broadcast %c0_i32_26 : i32 to vector<16x16xi32>
    %59 = arith.cmpi sge, %57, %58 : vector<16x16xi32>
    %c-1_i32_27 = arith.constant -1 : i32
    %60 = vector.broadcast %c-1_i32_27 : i32 to vector<16x16xi32>
    %61 = arith.addi %0, %60 : vector<16x16xi32>
    %c16_i32_28 = arith.constant 16 : i32
    %62 = vector.broadcast %c16_i32_28 : i32 to vector<16x16xi32>
    %63 = arith.cmpi slt, %61, %62 : vector<16x16xi32>
    %64 = arith.andi %59, %63 : vector<16x16xi1>
    %cst_29 = arith.constant 0.000000e+00 : f32
    %65 = vector.broadcast %cst_29 : f32 to vector<16x16xf32>
    %66 = arith.select %64, %55, %65 : vector<16x16xi1>, vector<16x16xf32>
    %67 = arith.truncf %66 : vector<16x16xf32> to vector<16x16xbf16>
    %c0_30 = arith.constant 0 : index
    %c3 = arith.constant 3 : index
    %c0_31 = arith.constant 0 : index
    %c0_32 = arith.constant 0 : index
    %68 = vector.load %arg2[%c0_30, %c3, %c0_31, %c0_32] : memref<2x8x16x16xbf16, #tpu.memory_space<vmem>>, vector<1x1x16x16xbf16>
    %69 = vector.shape_cast %68 : vector<1x1x16x16xbf16> to vector<16x16xbf16>
    %cst_33 = arith.constant dense<0.000000e+00> : vector<16x16xf32>
    %70 = tpu.matmul %67, %69, %cst_33 {dimension_numbers = #tpu.dot_dimension_numbers<[1], [0], [0], [1], [0, 0, 1, 1], [], []>} : vector<16x16xbf16>, vector<16x16xbf16>, vector<16x16xf32> -> vector<16x16xf32>
    %71 = arith.addf %54, %70 : vector<16x16xf32>
    %c0_i32_34 = arith.constant 0 : i32
    %72 = vector.broadcast %c0_i32_34 : i32 to vector<16x16xi32>
    %73 = arith.addi %0, %72 : vector<16x16xi32>
    %c0_i32_35 = arith.constant 0 : i32
    %74 = vector.broadcast %c0_i32_35 : i32 to vector<16x16xi32>
    %75 = arith.cmpi sge, %73, %74 : vector<16x16xi32>
    %c0_i32_36 = arith.constant 0 : i32
    %76 = vector.broadcast %c0_i32_36 : i32 to vector<16x16xi32>
    %77 = arith.addi %0, %76 : vector<16x16xi32>
    %c16_i32_37 = arith.constant 16 : i32
    %78 = vector.broadcast %c16_i32_37 : i32 to vector<16x16xi32>
    %79 = arith.cmpi slt, %77, %78 : vector<16x16xi32>
    %80 = arith.andi %75, %79 : vector<16x16xi1>
    %cst_38 = arith.constant 0.000000e+00 : f32
    %81 = vector.broadcast %cst_38 : f32 to vector<16x16xf32>
    %82 = arith.select %80, %2, %81 : vector<16x16xi1>, vector<16x16xf32>
    %83 = arith.truncf %82 : vector<16x16xf32> to vector<16x16xbf16>
    %c0_39 = arith.constant 0 : index
    %c4 = arith.constant 4 : index
    %c0_40 = arith.constant 0 : index
    %c0_41 = arith.constant 0 : index
    %84 = vector.load %arg2[%c0_39, %c4, %c0_40, %c0_41] : memref<2x8x16x16xbf16, #tpu.memory_space<vmem>>, vector<1x1x16x16xbf16>
    %85 = vector.shape_cast %84 : vector<1x1x16x16xbf16> to vector<16x16xbf16>
    %cst_42 = arith.constant dense<0.000000e+00> : vector<16x16xf32>
    %86 = tpu.matmul %83, %85, %cst_42 {dimension_numbers = #tpu.dot_dimension_numbers<[1], [0], [0], [1], [0, 0, 1, 1], [], []>} : vector<16x16xbf16>, vector<16x16xbf16>, vector<16x16xf32> -> vector<16x16xf32>
    %87 = arith.addf %71, %86 : vector<16x16xf32>
    %c15_i32 = arith.constant 15 : i32
    %88 = tpu.dynamic_rotate %2 by %c15_i32 dim 0 : vector<16x16xf32>, i32 -> vector<16x16xf32>
    %c1_i32_43 = arith.constant 1 : i32
    %89 = vector.broadcast %c1_i32_43 : i32 to vector<16x16xi32>
    %90 = arith.addi %0, %89 : vector<16x16xi32>
    %c0_i32_44 = arith.constant 0 : i32
    %91 = vector.broadcast %c0_i32_44 : i32 to vector<16x16xi32>
    %92 = arith.cmpi sge, %90, %91 : vector<16x16xi32>
    %c1_i32_45 = arith.constant 1 : i32
    %93 = vector.broadcast %c1_i32_45 : i32 to vector<16x16xi32>
    %94 = arith.addi %0, %93 : vector<16x16xi32>
    %c16_i32_46 = arith.constant 16 : i32
    %95 = vector.broadcast %c16_i32_46 : i32 to vector<16x16xi32>
    %96 = arith.cmpi slt, %94, %95 : vector<16x16xi32>
    %97 = arith.andi %92, %96 : vector<16x16xi1>
    %cst_47 = arith.constant 0.000000e+00 : f32
    %98 = vector.broadcast %cst_47 : f32 to vector<16x16xf32>
    %99 = arith.select %97, %88, %98 : vector<16x16xi1>, vector<16x16xf32>
    %100 = arith.truncf %99 : vector<16x16xf32> to vector<16x16xbf16>
    %c0_48 = arith.constant 0 : index
    %c5 = arith.constant 5 : index
    %c0_49 = arith.constant 0 : index
    %c0_50 = arith.constant 0 : index
    %101 = vector.load %arg2[%c0_48, %c5, %c0_49, %c0_50] : memref<2x8x16x16xbf16, #tpu.memory_space<vmem>>, vector<1x1x16x16xbf16>
    %102 = vector.shape_cast %101 : vector<1x1x16x16xbf16> to vector<16x16xbf16>
    %cst_51 = arith.constant dense<0.000000e+00> : vector<16x16xf32>
    %103 = tpu.matmul %100, %102, %cst_51 {dimension_numbers = #tpu.dot_dimension_numbers<[1], [0], [0], [1], [0, 0, 1, 1], [], []>} : vector<16x16xbf16>, vector<16x16xbf16>, vector<16x16xf32> -> vector<16x16xf32>
    %104 = arith.addf %87, %103 : vector<16x16xf32>
    %c14_i32 = arith.constant 14 : i32
    %105 = tpu.dynamic_rotate %2 by %c14_i32 dim 0 : vector<16x16xf32>, i32 -> vector<16x16xf32>
    %c2_i32_52 = arith.constant 2 : i32
    %106 = vector.broadcast %c2_i32_52 : i32 to vector<16x16xi32>
    %107 = arith.addi %0, %106 : vector<16x16xi32>
    %c0_i32_53 = arith.constant 0 : i32
    %108 = vector.broadcast %c0_i32_53 : i32 to vector<16x16xi32>
    %109 = arith.cmpi sge, %107, %108 : vector<16x16xi32>
    %c2_i32_54 = arith.constant 2 : i32
    %110 = vector.broadcast %c2_i32_54 : i32 to vector<16x16xi32>
    %111 = arith.addi %0, %110 : vector<16x16xi32>
    %c16_i32_55 = arith.constant 16 : i32
    %112 = vector.broadcast %c16_i32_55 : i32 to vector<16x16xi32>
    %113 = arith.cmpi slt, %111, %112 : vector<16x16xi32>
    %114 = arith.andi %109, %113 : vector<16x16xi1>
    %cst_56 = arith.constant 0.000000e+00 : f32
    %115 = vector.broadcast %cst_56 : f32 to vector<16x16xf32>
    %116 = arith.select %114, %105, %115 : vector<16x16xi1>, vector<16x16xf32>
    %117 = arith.truncf %116 : vector<16x16xf32> to vector<16x16xbf16>
    %c0_57 = arith.constant 0 : index
    %c6 = arith.constant 6 : index
    %c0_58 = arith.constant 0 : index
    %c0_59 = arith.constant 0 : index
    %118 = vector.load %arg2[%c0_57, %c6, %c0_58, %c0_59] : memref<2x8x16x16xbf16, #tpu.memory_space<vmem>>, vector<1x1x16x16xbf16>
    %119 = vector.shape_cast %118 : vector<1x1x16x16xbf16> to vector<16x16xbf16>
    %cst_60 = arith.constant dense<0.000000e+00> : vector<16x16xf32>
    %120 = tpu.matmul %117, %119, %cst_60 {dimension_numbers = #tpu.dot_dimension_numbers<[1], [0], [0], [1], [0, 0, 1, 1], [], []>} : vector<16x16xbf16>, vector<16x16xbf16>, vector<16x16xf32> -> vector<16x16xf32>
    %121 = arith.addf %104, %120 : vector<16x16xf32>
    %c13_i32 = arith.constant 13 : i32
    %122 = tpu.dynamic_rotate %2 by %c13_i32 dim 0 : vector<16x16xf32>, i32 -> vector<16x16xf32>
    %c3_i32_61 = arith.constant 3 : i32
    %123 = vector.broadcast %c3_i32_61 : i32 to vector<16x16xi32>
    %124 = arith.addi %0, %123 : vector<16x16xi32>
    %c0_i32_62 = arith.constant 0 : i32
    %125 = vector.broadcast %c0_i32_62 : i32 to vector<16x16xi32>
    %126 = arith.cmpi sge, %124, %125 : vector<16x16xi32>
    %c3_i32_63 = arith.constant 3 : i32
    %127 = vector.broadcast %c3_i32_63 : i32 to vector<16x16xi32>
    %128 = arith.addi %0, %127 : vector<16x16xi32>
    %c16_i32_64 = arith.constant 16 : i32
    %129 = vector.broadcast %c16_i32_64 : i32 to vector<16x16xi32>
    %130 = arith.cmpi slt, %128, %129 : vector<16x16xi32>
    %131 = arith.andi %126, %130 : vector<16x16xi1>
    %cst_65 = arith.constant 0.000000e+00 : f32
    %132 = vector.broadcast %cst_65 : f32 to vector<16x16xf32>
    %133 = arith.select %131, %122, %132 : vector<16x16xi1>, vector<16x16xf32>
    %134 = arith.truncf %133 : vector<16x16xf32> to vector<16x16xbf16>
    %c0_66 = arith.constant 0 : index
    %c7 = arith.constant 7 : index
    %c0_67 = arith.constant 0 : index
    %c0_68 = arith.constant 0 : index
    %135 = vector.load %arg2[%c0_66, %c7, %c0_67, %c0_68] : memref<2x8x16x16xbf16, #tpu.memory_space<vmem>>, vector<1x1x16x16xbf16>
    %136 = vector.shape_cast %135 : vector<1x1x16x16xbf16> to vector<16x16xbf16>
    %cst_69 = arith.constant dense<0.000000e+00> : vector<16x16xf32>
    %137 = tpu.matmul %134, %136, %cst_69 {dimension_numbers = #tpu.dot_dimension_numbers<[1], [0], [0], [1], [0, 0, 1, 1], [], []>} : vector<16x16xbf16>, vector<16x16xbf16>, vector<16x16xf32> -> vector<16x16xf32>
    %138 = arith.addf %121, %137 : vector<16x16xf32>
    %c0_70 = arith.constant 0 : index
    %c0_71 = arith.constant 0 : index
    %c0_72 = arith.constant 0 : index
    %139 = vector.load %arg3[%c0_70, %c0_71, %c0_72] : memref<2x1x16xf32, #tpu.memory_space<vmem>>, vector<1x1x16xf32>
    %140 = vector.shape_cast %139 : vector<1x1x16xf32> to vector<1x16xf32>
    %141 = vector.broadcast %140 : vector<1x16xf32> to vector<16x16xf32>
    %142 = arith.addf %138, %141 : vector<16x16xf32>
    %cst_73 = arith.constant 5.000000e-01 : f32
    %143 = vector.broadcast %cst_73 : f32 to vector<16x16xf32>
    %144 = arith.mulf %143, %142 : vector<16x16xf32>
    %cst_74 = arith.constant 2.000000e+00 : f32
    %145 = math.sqrt %cst_74 : f32
    %146 = vector.broadcast %145 : f32 to vector<16x16xf32>
    %147 = arith.divf %142, %146 : vector<16x16xf32>
    %148 = math.erf %147 : vector<16x16xf32>
    %cst_75 = arith.constant 1.000000e+00 : f32
    %149 = vector.broadcast %cst_75 : f32 to vector<16x16xf32>
    %150 = arith.addf %149, %148 : vector<16x16xf32>
    %151 = arith.mulf %144, %150 : vector<16x16xf32>
    %c0_76 = arith.constant 0 : index
    %c1_77 = arith.constant 1 : index
    %c0_78 = arith.constant 0 : index
    %c0_79 = arith.constant 0 : index
    %152 = vector.load %arg1[%c0_76, %c1_77, %c0_78, %c0_79] : memref<1x2x16x16xf32, #tpu.memory_space<vmem>>, vector<1x1x16x16xf32>
    %153 = vector.shape_cast %152 : vector<1x1x16x16xf32> to vector<16x16xf32>
    %cst_80 = arith.constant 0.000000e+00 : f32
    %154 = vector.broadcast %cst_80 : f32 to vector<16x16xf32>
    %c4_i32_81 = arith.constant 4 : i32
    %155 = tpu.dynamic_rotate %153 by %c4_i32_81 dim 0 : vector<16x16xf32>, i32 -> vector<16x16xf32>
    %c-4_i32_82 = arith.constant -4 : i32
    %156 = vector.broadcast %c-4_i32_82 : i32 to vector<16x16xi32>
    %157 = arith.addi %0, %156 : vector<16x16xi32>
    %c0_i32_83 = arith.constant 0 : i32
    %158 = vector.broadcast %c0_i32_83 : i32 to vector<16x16xi32>
    %159 = arith.cmpi sge, %157, %158 : vector<16x16xi32>
    %c-4_i32_84 = arith.constant -4 : i32
    %160 = vector.broadcast %c-4_i32_84 : i32 to vector<16x16xi32>
    %161 = arith.addi %0, %160 : vector<16x16xi32>
    %c16_i32_85 = arith.constant 16 : i32
    %162 = vector.broadcast %c16_i32_85 : i32 to vector<16x16xi32>
    %163 = arith.cmpi slt, %161, %162 : vector<16x16xi32>
    %164 = arith.andi %159, %163 : vector<16x16xi1>
    %cst_86 = arith.constant 0.000000e+00 : f32
    %165 = vector.broadcast %cst_86 : f32 to vector<16x16xf32>
    %166 = arith.select %164, %155, %165 : vector<16x16xi1>, vector<16x16xf32>
    %167 = arith.truncf %166 : vector<16x16xf32> to vector<16x16xbf16>
    %c1_87 = arith.constant 1 : index
    %c0_88 = arith.constant 0 : index
    %c0_89 = arith.constant 0 : index
    %c0_90 = arith.constant 0 : index
    %168 = vector.load %arg2[%c1_87, %c0_88, %c0_89, %c0_90] : memref<2x8x16x16xbf16, #tpu.memory_space<vmem>>, vector<1x1x16x16xbf16>
    %169 = vector.shape_cast %168 : vector<1x1x16x16xbf16> to vector<16x16xbf16>
    %cst_91 = arith.constant dense<0.000000e+00> : vector<16x16xf32>
    %170 = tpu.matmul %167, %169, %cst_91 {dimension_numbers = #tpu.dot_dimension_numbers<[1], [0], [0], [1], [0, 0, 1, 1], [], []>} : vector<16x16xbf16>, vector<16x16xbf16>, vector<16x16xf32> -> vector<16x16xf32>
    %171 = arith.addf %154, %170 : vector<16x16xf32>
    %c3_i32_92 = arith.constant 3 : i32
    %172 = tpu.dynamic_rotate %153 by %c3_i32_92 dim 0 : vector<16x16xf32>, i32 -> vector<16x16xf32>
    %c-3_i32_93 = arith.constant -3 : i32
    %173 = vector.broadcast %c-3_i32_93 : i32 to vector<16x16xi32>
    %174 = arith.addi %0, %173 : vector<16x16xi32>
    %c0_i32_94 = arith.constant 0 : i32
    %175 = vector.broadcast %c0_i32_94 : i32 to vector<16x16xi32>
    %176 = arith.cmpi sge, %174, %175 : vector<16x16xi32>
    %c-3_i32_95 = arith.constant -3 : i32
    %177 = vector.broadcast %c-3_i32_95 : i32 to vector<16x16xi32>
    %178 = arith.addi %0, %177 : vector<16x16xi32>
    %c16_i32_96 = arith.constant 16 : i32
    %179 = vector.broadcast %c16_i32_96 : i32 to vector<16x16xi32>
    %180 = arith.cmpi slt, %178, %179 : vector<16x16xi32>
    %181 = arith.andi %176, %180 : vector<16x16xi1>
    %cst_97 = arith.constant 0.000000e+00 : f32
    %182 = vector.broadcast %cst_97 : f32 to vector<16x16xf32>
    %183 = arith.select %181, %172, %182 : vector<16x16xi1>, vector<16x16xf32>
    %184 = arith.truncf %183 : vector<16x16xf32> to vector<16x16xbf16>
    %c1_98 = arith.constant 1 : index
    %c1_99 = arith.constant 1 : index
    %c0_100 = arith.constant 0 : index
    %c0_101 = arith.constant 0 : index
    %185 = vector.load %arg2[%c1_98, %c1_99, %c0_100, %c0_101] : memref<2x8x16x16xbf16, #tpu.memory_space<vmem>>, vector<1x1x16x16xbf16>
    %186 = vector.shape_cast %185 : vector<1x1x16x16xbf16> to vector<16x16xbf16>
    %cst_102 = arith.constant dense<0.000000e+00> : vector<16x16xf32>
    %187 = tpu.matmul %184, %186, %cst_102 {dimension_numbers = #tpu.dot_dimension_numbers<[1], [0], [0], [1], [0, 0, 1, 1], [], []>} : vector<16x16xbf16>, vector<16x16xbf16>, vector<16x16xf32> -> vector<16x16xf32>
    %188 = arith.addf %171, %187 : vector<16x16xf32>
    %c2_i32_103 = arith.constant 2 : i32
    %189 = tpu.dynamic_rotate %153 by %c2_i32_103 dim 0 : vector<16x16xf32>, i32 -> vector<16x16xf32>
    %c-2_i32_104 = arith.constant -2 : i32
    %190 = vector.broadcast %c-2_i32_104 : i32 to vector<16x16xi32>
    %191 = arith.addi %0, %190 : vector<16x16xi32>
    %c0_i32_105 = arith.constant 0 : i32
    %192 = vector.broadcast %c0_i32_105 : i32 to vector<16x16xi32>
    %193 = arith.cmpi sge, %191, %192 : vector<16x16xi32>
    %c-2_i32_106 = arith.constant -2 : i32
    %194 = vector.broadcast %c-2_i32_106 : i32 to vector<16x16xi32>
    %195 = arith.addi %0, %194 : vector<16x16xi32>
    %c16_i32_107 = arith.constant 16 : i32
    %196 = vector.broadcast %c16_i32_107 : i32 to vector<16x16xi32>
    %197 = arith.cmpi slt, %195, %196 : vector<16x16xi32>
    %198 = arith.andi %193, %197 : vector<16x16xi1>
    %cst_108 = arith.constant 0.000000e+00 : f32
    %199 = vector.broadcast %cst_108 : f32 to vector<16x16xf32>
    %200 = arith.select %198, %189, %199 : vector<16x16xi1>, vector<16x16xf32>
    %201 = arith.truncf %200 : vector<16x16xf32> to vector<16x16xbf16>
    %c1_109 = arith.constant 1 : index
    %c2_110 = arith.constant 2 : index
    %c0_111 = arith.constant 0 : index
    %c0_112 = arith.constant 0 : index
    %202 = vector.load %arg2[%c1_109, %c2_110, %c0_111, %c0_112] : memref<2x8x16x16xbf16, #tpu.memory_space<vmem>>, vector<1x1x16x16xbf16>
    %203 = vector.shape_cast %202 : vector<1x1x16x16xbf16> to vector<16x16xbf16>
    %cst_113 = arith.constant dense<0.000000e+00> : vector<16x16xf32>
    %204 = tpu.matmul %201, %203, %cst_113 {dimension_numbers = #tpu.dot_dimension_numbers<[1], [0], [0], [1], [0, 0, 1, 1], [], []>} : vector<16x16xbf16>, vector<16x16xbf16>, vector<16x16xf32> -> vector<16x16xf32>
    %205 = arith.addf %188, %204 : vector<16x16xf32>
    %c1_i32_114 = arith.constant 1 : i32
    %206 = tpu.dynamic_rotate %153 by %c1_i32_114 dim 0 : vector<16x16xf32>, i32 -> vector<16x16xf32>
    %c-1_i32_115 = arith.constant -1 : i32
    %207 = vector.broadcast %c-1_i32_115 : i32 to vector<16x16xi32>
    %208 = arith.addi %0, %207 : vector<16x16xi32>
    %c0_i32_116 = arith.constant 0 : i32
    %209 = vector.broadcast %c0_i32_116 : i32 to vector<16x16xi32>
    %210 = arith.cmpi sge, %208, %209 : vector<16x16xi32>
    %c-1_i32_117 = arith.constant -1 : i32
    %211 = vector.broadcast %c-1_i32_117 : i32 to vector<16x16xi32>
    %212 = arith.addi %0, %211 : vector<16x16xi32>
    %c16_i32_118 = arith.constant 16 : i32
    %213 = vector.broadcast %c16_i32_118 : i32 to vector<16x16xi32>
    %214 = arith.cmpi slt, %212, %213 : vector<16x16xi32>
    %215 = arith.andi %210, %214 : vector<16x16xi1>
    %cst_119 = arith.constant 0.000000e+00 : f32
    %216 = vector.broadcast %cst_119 : f32 to vector<16x16xf32>
    %217 = arith.select %215, %206, %216 : vector<16x16xi1>, vector<16x16xf32>
    %218 = arith.truncf %217 : vector<16x16xf32> to vector<16x16xbf16>
    %c1_120 = arith.constant 1 : index
    %c3_121 = arith.constant 3 : index
    %c0_122 = arith.constant 0 : index
    %c0_123 = arith.constant 0 : index
    %219 = vector.load %arg2[%c1_120, %c3_121, %c0_122, %c0_123] : memref<2x8x16x16xbf16, #tpu.memory_space<vmem>>, vector<1x1x16x16xbf16>
    %220 = vector.shape_cast %219 : vector<1x1x16x16xbf16> to vector<16x16xbf16>
    %cst_124 = arith.constant dense<0.000000e+00> : vector<16x16xf32>
    %221 = tpu.matmul %218, %220, %cst_124 {dimension_numbers = #tpu.dot_dimension_numbers<[1], [0], [0], [1], [0, 0, 1, 1], [], []>} : vector<16x16xbf16>, vector<16x16xbf16>, vector<16x16xf32> -> vector<16x16xf32>
    %222 = arith.addf %205, %221 : vector<16x16xf32>
    %c0_i32_125 = arith.constant 0 : i32
    %223 = vector.broadcast %c0_i32_125 : i32 to vector<16x16xi32>
    %224 = arith.addi %0, %223 : vector<16x16xi32>
    %c0_i32_126 = arith.constant 0 : i32
    %225 = vector.broadcast %c0_i32_126 : i32 to vector<16x16xi32>
    %226 = arith.cmpi sge, %224, %225 : vector<16x16xi32>
    %c0_i32_127 = arith.constant 0 : i32
    %227 = vector.broadcast %c0_i32_127 : i32 to vector<16x16xi32>
    %228 = arith.addi %0, %227 : vector<16x16xi32>
    %c16_i32_128 = arith.constant 16 : i32
    %229 = vector.broadcast %c16_i32_128 : i32 to vector<16x16xi32>
    %230 = arith.cmpi slt, %228, %229 : vector<16x16xi32>
    %231 = arith.andi %226, %230 : vector<16x16xi1>
    %cst_129 = arith.constant 0.000000e+00 : f32
    %232 = vector.broadcast %cst_129 : f32 to vector<16x16xf32>
    %233 = arith.select %231, %153, %232 : vector<16x16xi1>, vector<16x16xf32>
    %234 = arith.truncf %233 : vector<16x16xf32> to vector<16x16xbf16>
    %c1_130 = arith.constant 1 : index
    %c4_131 = arith.constant 4 : index
    %c0_132 = arith.constant 0 : index
    %c0_133 = arith.constant 0 : index
    %235 = vector.load %arg2[%c1_130, %c4_131, %c0_132, %c0_133] : memref<2x8x16x16xbf16, #tpu.memory_space<vmem>>, vector<1x1x16x16xbf16>
    %236 = vector.shape_cast %235 : vector<1x1x16x16xbf16> to vector<16x16xbf16>
    %cst_134 = arith.constant dense<0.000000e+00> : vector<16x16xf32>
    %237 = tpu.matmul %234, %236, %cst_134 {dimension_numbers = #tpu.dot_dimension_numbers<[1], [0], [0], [1], [0, 0, 1, 1], [], []>} : vector<16x16xbf16>, vector<16x16xbf16>, vector<16x16xf32> -> vector<16x16xf32>
    %238 = arith.addf %222, %237 : vector<16x16xf32>
    %c15_i32_135 = arith.constant 15 : i32
    %239 = tpu.dynamic_rotate %153 by %c15_i32_135 dim 0 : vector<16x16xf32>, i32 -> vector<16x16xf32>
    %c1_i32_136 = arith.constant 1 : i32
    %240 = vector.broadcast %c1_i32_136 : i32 to vector<16x16xi32>
    %241 = arith.addi %0, %240 : vector<16x16xi32>
    %c0_i32_137 = arith.constant 0 : i32
    %242 = vector.broadcast %c0_i32_137 : i32 to vector<16x16xi32>
    %243 = arith.cmpi sge, %241, %242 : vector<16x16xi32>
    %c1_i32_138 = arith.constant 1 : i32
    %244 = vector.broadcast %c1_i32_138 : i32 to vector<16x16xi32>
    %245 = arith.addi %0, %244 : vector<16x16xi32>
    %c16_i32_139 = arith.constant 16 : i32
    %246 = vector.broadcast %c16_i32_139 : i32 to vector<16x16xi32>
    %247 = arith.cmpi slt, %245, %246 : vector<16x16xi32>
    %248 = arith.andi %243, %247 : vector<16x16xi1>
    %cst_140 = arith.constant 0.000000e+00 : f32
    %249 = vector.broadcast %cst_140 : f32 to vector<16x16xf32>
    %250 = arith.select %248, %239, %249 : vector<16x16xi1>, vector<16x16xf32>
    %251 = arith.truncf %250 : vector<16x16xf32> to vector<16x16xbf16>
    %c1_141 = arith.constant 1 : index
    %c5_142 = arith.constant 5 : index
    %c0_143 = arith.constant 0 : index
    %c0_144 = arith.constant 0 : index
    %252 = vector.load %arg2[%c1_141, %c5_142, %c0_143, %c0_144] : memref<2x8x16x16xbf16, #tpu.memory_space<vmem>>, vector<1x1x16x16xbf16>
    %253 = vector.shape_cast %252 : vector<1x1x16x16xbf16> to vector<16x16xbf16>
    %cst_145 = arith.constant dense<0.000000e+00> : vector<16x16xf32>
    %254 = tpu.matmul %251, %253, %cst_145 {dimension_numbers = #tpu.dot_dimension_numbers<[1], [0], [0], [1], [0, 0, 1, 1], [], []>} : vector<16x16xbf16>, vector<16x16xbf16>, vector<16x16xf32> -> vector<16x16xf32>
    %255 = arith.addf %238, %254 : vector<16x16xf32>
    %c14_i32_146 = arith.constant 14 : i32
    %256 = tpu.dynamic_rotate %153 by %c14_i32_146 dim 0 : vector<16x16xf32>, i32 -> vector<16x16xf32>
    %c2_i32_147 = arith.constant 2 : i32
    %257 = vector.broadcast %c2_i32_147 : i32 to vector<16x16xi32>
    %258 = arith.addi %0, %257 : vector<16x16xi32>
    %c0_i32_148 = arith.constant 0 : i32
    %259 = vector.broadcast %c0_i32_148 : i32 to vector<16x16xi32>
    %260 = arith.cmpi sge, %258, %259 : vector<16x16xi32>
    %c2_i32_149 = arith.constant 2 : i32
    %261 = vector.broadcast %c2_i32_149 : i32 to vector<16x16xi32>
    %262 = arith.addi %0, %261 : vector<16x16xi32>
    %c16_i32_150 = arith.constant 16 : i32
    %263 = vector.broadcast %c16_i32_150 : i32 to vector<16x16xi32>
    %264 = arith.cmpi slt, %262, %263 : vector<16x16xi32>
    %265 = arith.andi %260, %264 : vector<16x16xi1>
    %cst_151 = arith.constant 0.000000e+00 : f32
    %266 = vector.broadcast %cst_151 : f32 to vector<16x16xf32>
    %267 = arith.select %265, %256, %266 : vector<16x16xi1>, vector<16x16xf32>
    %268 = arith.truncf %267 : vector<16x16xf32> to vector<16x16xbf16>
    %c1_152 = arith.constant 1 : index
    %c6_153 = arith.constant 6 : index
    %c0_154 = arith.constant 0 : index
    %c0_155 = arith.constant 0 : index
    %269 = vector.load %arg2[%c1_152, %c6_153, %c0_154, %c0_155] : memref<2x8x16x16xbf16, #tpu.memory_space<vmem>>, vector<1x1x16x16xbf16>
    %270 = vector.shape_cast %269 : vector<1x1x16x16xbf16> to vector<16x16xbf16>
    %cst_156 = arith.constant dense<0.000000e+00> : vector<16x16xf32>
    %271 = tpu.matmul %268, %270, %cst_156 {dimension_numbers = #tpu.dot_dimension_numbers<[1], [0], [0], [1], [0, 0, 1, 1], [], []>} : vector<16x16xbf16>, vector<16x16xbf16>, vector<16x16xf32> -> vector<16x16xf32>
    %272 = arith.addf %255, %271 : vector<16x16xf32>
    %c13_i32_157 = arith.constant 13 : i32
    %273 = tpu.dynamic_rotate %153 by %c13_i32_157 dim 0 : vector<16x16xf32>, i32 -> vector<16x16xf32>
    %c3_i32_158 = arith.constant 3 : i32
    %274 = vector.broadcast %c3_i32_158 : i32 to vector<16x16xi32>
    %275 = arith.addi %0, %274 : vector<16x16xi32>
    %c0_i32_159 = arith.constant 0 : i32
    %276 = vector.broadcast %c0_i32_159 : i32 to vector<16x16xi32>
    %277 = arith.cmpi sge, %275, %276 : vector<16x16xi32>
    %c3_i32_160 = arith.constant 3 : i32
    %278 = vector.broadcast %c3_i32_160 : i32 to vector<16x16xi32>
    %279 = arith.addi %0, %278 : vector<16x16xi32>
    %c16_i32_161 = arith.constant 16 : i32
    %280 = vector.broadcast %c16_i32_161 : i32 to vector<16x16xi32>
    %281 = arith.cmpi slt, %279, %280 : vector<16x16xi32>
    %282 = arith.andi %277, %281 : vector<16x16xi1>
    %cst_162 = arith.constant 0.000000e+00 : f32
    %283 = vector.broadcast %cst_162 : f32 to vector<16x16xf32>
    %284 = arith.select %282, %273, %283 : vector<16x16xi1>, vector<16x16xf32>
    %285 = arith.truncf %284 : vector<16x16xf32> to vector<16x16xbf16>
    %c1_163 = arith.constant 1 : index
    %c7_164 = arith.constant 7 : index
    %c0_165 = arith.constant 0 : index
    %c0_166 = arith.constant 0 : index
    %286 = vector.load %arg2[%c1_163, %c7_164, %c0_165, %c0_166] : memref<2x8x16x16xbf16, #tpu.memory_space<vmem>>, vector<1x1x16x16xbf16>
    %287 = vector.shape_cast %286 : vector<1x1x16x16xbf16> to vector<16x16xbf16>
    %cst_167 = arith.constant dense<0.000000e+00> : vector<16x16xf32>
    %288 = tpu.matmul %285, %287, %cst_167 {dimension_numbers = #tpu.dot_dimension_numbers<[1], [0], [0], [1], [0, 0, 1, 1], [], []>} : vector<16x16xbf16>, vector<16x16xbf16>, vector<16x16xf32> -> vector<16x16xf32>
    %289 = arith.addf %272, %288 : vector<16x16xf32>
    %c1_168 = arith.constant 1 : index
    %c0_169 = arith.constant 0 : index
    %c0_170 = arith.constant 0 : index
    %290 = vector.load %arg3[%c1_168, %c0_169, %c0_170] : memref<2x1x16xf32, #tpu.memory_space<vmem>>, vector<1x1x16xf32>
    %291 = vector.shape_cast %290 : vector<1x1x16xf32> to vector<1x16xf32>
    %292 = vector.broadcast %291 : vector<1x16xf32> to vector<16x16xf32>
    %293 = arith.addf %289, %292 : vector<16x16xf32>
    %cst_171 = arith.constant 5.000000e-01 : f32
    %294 = vector.broadcast %cst_171 : f32 to vector<16x16xf32>
    %295 = arith.mulf %294, %293 : vector<16x16xf32>
    %cst_172 = arith.constant 2.000000e+00 : f32
    %296 = math.sqrt %cst_172 : f32
    %297 = vector.broadcast %296 : f32 to vector<16x16xf32>
    %298 = arith.divf %293, %297 : vector<16x16xf32>
    %299 = math.erf %298 : vector<16x16xf32>
    %cst_173 = arith.constant 1.000000e+00 : f32
    %300 = vector.broadcast %cst_173 : f32 to vector<16x16xf32>
    %301 = arith.addf %300, %299 : vector<16x16xf32>
    %302 = arith.mulf %295, %301 : vector<16x16xf32>
    %303 = tpu.concatenate %2, %153 in 1 : vector<16x16xf32>, vector<16x16xf32> -> vector<16x32xf32>
    %304 = tpu.concatenate %151, %302 in 1 : vector<16x16xf32>, vector<16x16xf32> -> vector<16x32xf32>
    %305 = arith.addf %303, %304 : vector<16x32xf32>
    %c0_174 = arith.constant 0 : index
    %c0_175 = arith.constant 0 : index
    %306 = vector.load %arg4[%c0_174, %c0_175] : memref<1x32xf32, #tpu.memory_space<vmem>>, vector<1x32xf32>
    %c0_176 = arith.constant 0 : index
    %c0_177 = arith.constant 0 : index
    %307 = vector.load %arg5[%c0_176, %c0_177] : memref<1x32xf32, #tpu.memory_space<vmem>>, vector<1x32xf32>
    %cst_178 = arith.constant dense<0.000000e+00> : vector<16xf32>
    %308 = vector.multi_reduction <add>, %305, %cst_178 [1] : vector<16x32xf32> to vector<16xf32>
    %309 = vector.shape_cast %308 : vector<16xf32> to vector<16x1xf32>
    %cst_179 = arith.constant 3.200000e+01 : f32
    %310 = vector.broadcast %cst_179 : f32 to vector<16x1xf32>
    %311 = arith.divf %309, %310 : vector<16x1xf32>
    %312 = vector.broadcast %311 : vector<16x1xf32> to vector<16x32xf32>
    %313 = arith.subf %305, %312 : vector<16x32xf32>
    %314 = arith.mulf %313, %313 : vector<16x32xf32>
    %cst_180 = arith.constant dense<0.000000e+00> : vector<16xf32>
    %315 = vector.multi_reduction <add>, %314, %cst_180 [1] : vector<16x32xf32> to vector<16xf32>
    %316 = vector.shape_cast %315 : vector<16xf32> to vector<16x1xf32>
    %cst_181 = arith.constant 3.200000e+01 : f32
    %317 = vector.broadcast %cst_181 : f32 to vector<16x1xf32>
    %318 = arith.divf %316, %317 : vector<16x1xf32>
    %319 = vector.broadcast %311 : vector<16x1xf32> to vector<16x32xf32>
    %320 = arith.subf %305, %319 : vector<16x32xf32>
    %cst_182 = arith.constant 9.99999974E-6 : f32
    %321 = vector.broadcast %cst_182 : f32 to vector<16x1xf32>
    %322 = arith.addf %318, %321 : vector<16x1xf32>
    %323 = math.rsqrt %322 : vector<16x1xf32>
    %324 = vector.broadcast %323 : vector<16x1xf32> to vector<16x32xf32>
    %325 = arith.mulf %320, %324 : vector<16x32xf32>
    %326 = vector.broadcast %306 : vector<1x32xf32> to vector<16x32xf32>
    %327 = arith.mulf %325, %326 : vector<16x32xf32>
    %328 = vector.broadcast %307 : vector<1x32xf32> to vector<16x32xf32>
    %329 = arith.addf %327, %328 : vector<16x32xf32>
    %c0_183 = arith.constant 0 : index
    %c0_184 = arith.constant 0 : index
    %c0_185 = arith.constant 0 : index
    %330 = vector.load %arg6[%c0_183, %c0_184, %c0_185] : memref<1x16x32xf32, #tpu.memory_space<vmem>>, vector<1x16x32xf32>
    %331 = vector.shape_cast %330 : vector<1x16x32xf32> to vector<16x32xf32>
    %332 = vector.shape_cast %329 : vector<16x32xf32> to vector<1x16x32xf32>
    tpu.vector_store %arg6[%c0_183, %c0_184, %c0_185], %332 {strides = array<i32>} : memref<1x16x32xf32, #tpu.memory_space<vmem>>, vector<1x16x32xf32>,
    return
  }
  func.func @transform_0(%arg0: i32) -> (i32, i32, i32, i32) {
    %c0_i32 = arith.constant 0 : i32
    %c0_i32_0 = arith.constant 0 : i32
    %c0_i32_1 = arith.constant 0 : i32
    %c0_i32_2 = arith.constant 0 : i32
    return %arg0, %c0_i32, %c0_i32_0, %c0_i32_1 : i32, i32, i32, i32
  }
  func.func @transform_1(%arg0: i32) -> (i32, i32, i32, i32) {
    %c0_i32 = arith.constant 0 : i32
    %c0_i32_0 = arith.constant 0 : i32
    %c0_i32_1 = arith.constant 0 : i32
    %c0_i32_2 = arith.constant 0 : i32
    %c0_i32_3 = arith.constant 0 : i32
    return %c0_i32, %c0_i32_0, %c0_i32_1, %c0_i32_2 : i32, i32, i32, i32
  }
  func.func @transform_2(%arg0: i32) -> (i32, i32, i32) {
    %c0_i32 = arith.constant 0 : i32
    %c0_i32_0 = arith.constant 0 : i32
    %c0_i32_1 = arith.constant 0 : i32
    %c0_i32_2 = arith.constant 0 : i32
    return %c0_i32, %c0_i32_0, %c0_i32_1 : i32, i32, i32
  }
  func.func @transform_3(%arg0: i32) -> (i32, i32) {
    %c0_i32 = arith.constant 0 : i32
    %c0_i32_0 = arith.constant 0 : i32
    %c0_i32_1 = arith.constant 0 : i32
    return %c0_i32, %c0_i32_0 : i32, i32
  }
  func.func @transform_4(%arg0: i32) -> (i32, i32) {
    %c0_i32 = arith.constant 0 : i32
    %c0_i32_0 = arith.constant 0 : i32
    %c0_i32_1 = arith.constant 0 : i32
    return %c0_i32, %c0_i32_0 : i32, i32
  }
  func.func @transform_5(%arg0: i32) -> (i32, i32, i32) {
    %c0_i32 = arith.constant 0 : i32
    %c0_i32_0 = arith.constant 0 : i32
    %c0_i32_1 = arith.constant 0 : i32
    return %arg0, %c0_i32, %c0_i32_0 : i32, i32, i32
  }
}

</mosaic_0001>

<llo_original>
// kernel: tpu_custom_call.1
$region0: #{tpu_custom_call.1}
  #allocation0 [shape = 'u32[]', space=smem, size = 0x4, offset = 0x4, fixed_abs, tag = 'smem constant byte address 0x4 - core index']
  #allocation1 [shape = 'u32[144,128]{1,0:T(1,128)}', space=vmem, size = 0x12000, scoped, tag = 'internal scratch']
  %s0 = inlined_call_operand.hbm [shape: f32[2,2,16,16], index: 0, kind: input, shape index: {}]
  %s1 = inlined_call_operand.hbm [shape: bf16[2,8,16,16], index: 1, kind: input, shape index: {}]
  %s2 = inlined_call_operand.vmem [shape: f32[2,1,16], index: 2, kind: input, shape index: {}]
  %s3 = inlined_call_operand.vmem [shape: f32[1,32], index: 3, kind: input, shape index: {}]
  %s4 = inlined_call_operand.vmem [shape: f32[1,32], index: 4, kind: input, shape index: {}]
  %s5 = inlined_call_operand.hbm [shape: f32[2,16,32], index: 5, kind: output, shape index: {}]
  %s6 = sld [smem:[#allocation0]]
  $region61: #{tpu_custom_call.1} parent=0
    _
  %s8 = ssub.s32 1, %s6
  %s9 = scalar_select 0, %s8, %s6
  $region1: #{tpu_custom_call.1} parent=0
    #allocation2 [shape = 'u8[32768]{0}', space=vmem, size = 0x8000, scoped, tag = 'input window, operand 0']
    #allocation3 [shape = 's32[2]{0}', space=sflag, size = 0x8, scoped, tag = 'scoped memory for tpu_custom_call.1']
    #allocation4 [shape = 's32[2]{0}', space=sflag, size = 0x8, scoped, tag = 'scoped memory for tpu_custom_call.1']
    #allocation5 [shape = 'u8[65536]{0}', space=vmem, size = 0x10000, scoped, tag = 'input window, operand 1, single buffered']
    #allocation6 [shape = 's32[1]{0}', space=sflag, size = 0x4, scoped, tag = 'scoped memory for tpu_custom_call.1']
    #allocation7 [shape = 'u8[16384]{0}', space=vmem, size = 0x4000, scoped, tag = 'output window, operand 0']
    %10 = vsyncpa [#allocation3], 0
    %s11 = scalar_lea.sflag [#allocation3], 1
    %12 = vsyncpa %s11, 0
    %13 = vsyncpa [#allocation6], 0
    %14 = vsyncpa [#allocation4], 0
    %s15 = scalar_lea.sflag [#allocation4], 1
    %16 = vsyncpa %s15, 0
    loop: start=0, step=1, limit=4
    $region2: #{tpu_custom_call.1} parent=1 // loop_pre_header
      _
    $region3: #{tpu_custom_call.1} parent=1 // loop_header
      %s18 = sphi 0, %s22
      %p19 = scmp.ge.s32.totalorder %s18, 4
      %s28 = sphi 0, %s30
      %s31 = sphi 0, %s28
      %s32 = sphi 0, %s31
      %s48 = sphi 0, %s32
      %s52 = sphi 0, %s52
      %s54 = sphi 0, %s52
      %s55 = sphi 0, %s54
      %s69 = sphi 0, %s55
      %s73 = sphi 0, %s73
      %s75 = sphi 0, %s73
      %s76 = sphi 0, %s75
      %s90 = sphi 0, %s76
      %s94 = sphi 0, %s94
      %s96 = sphi 0, %s94
      %s97 = sphi 0, %s96
      %s111 = sphi 0, %s97
      %s115 = sphi 0, %s115
      %s117 = sphi 0, %s115
      %s118 = sphi 0, %s117
      %s132 = sphi 0, %s118
      %s138 = sphi 0, %s140
      %s141 = sphi 0, %s138
      %s142 = sphi 0, %s141
      %s158 = sphi 0, %s142
    $region4: #{tpu_custom_call.1} parent=1 // loop_header_branch
      %21 = sbr.rel (%p19) target = $region8
    $region5: #{tpu_custom_call.1} parent=1 // loop_body
      %s23 = ssub.s32 %s18, 1
      %s24 = ssub.s32 %s18, 2
      %s25 = sadd.s32 %s18, 1
      %s26 = ssub.s32 %s18, %s25
      %p27 = scmp.eq.s32.totalorder %s26, 0
      %s29 = sadd.s32 %s28, 1
      %s30 = scalar_select %p27, %s28, %s29
      %p33 = pneg %p27
      %p34 = scmp.eq.s32.totalorder %s18, 1
      %p35 = por %p33, %p34
      %p36 = scmp.ne.s32.totalorder %s28, %s31
      %p37 = scmp.eq.s32.totalorder %s18, 0
      %p38 = por %p36, %p37
      %p39 = scmp.ne.s32.totalorder %s28, %s31
      %p40 = scmp.eq.s32.totalorder %s23, 1
      %p41 = por %p39, %p40
      %p42 = scmp.ne.s32.totalorder %s31, %s32
      %p43 = scmp.eq.s32.totalorder %s23, 0
      %p44 = por %p42, %p43
      %p45 = scmp.ne.s32.totalorder %s31, %s32
      %p46 = scmp.eq.s32.totalorder %s24, 1
      %p47 = por %p45, %p46
      %p49 = scmp.ne.s32.totalorder %s32, %s48
      %p50 = scmp.eq.s32.totalorder %s24, 0
      %p51 = por %p49, %p50
      %s53 = sadd.s32 %s52, 1
      %p56 = scmp.eq.s32.totalorder %s18, 1
      %p57 = scmp.ne.s32.totalorder %s52, %s54
      %p58 = scmp.eq.s32.totalorder %s18, 0
      %p59 = por %p57, %p58
      %p60 = scmp.ne.s32.totalorder %s52, %s54
      %p61 = scmp.eq.s32.totalorder %s23, 1
      %p62 = por %p60, %p61
      %p63 = scmp.ne.s32.totalorder %s54, %s55
      %p64 = scmp.eq.s32.totalorder %s23, 0
      %p65 = por %p63, %p64
      %p66 = scmp.ne.s32.totalorder %s54, %s55
      %p67 = scmp.eq.s32.totalorder %s24, 1
      %p68 = por %p66, %p67
      %p70 = scmp.ne.s32.totalorder %s55, %s69
      %p71 = scmp.eq.s32.totalorder %s24, 0
      %p72 = por %p70, %p71
      %s74 = sadd.s32 %s73, 1
      %p77 = scmp.eq.s32.totalorder %s18, 1
      %p78 = scmp.ne.s32.totalorder %s73, %s75
      %p79 = scmp.eq.s32.totalorder %s18, 0
      %p80 = por %p78, %p79
      %p81 = scmp.ne.s32.totalorder %s73, %s75
      %p82 = scmp.eq.s32.totalorder %s23, 1
      %p83 = por %p81, %p82
      %p84 = scmp.ne.s32.totalorder %s75, %s76
      %p85 = scmp.eq.s32.totalorder %s23, 0
      %p86 = por %p84, %p85
      %p87 = scmp.ne.s32.totalorder %s75, %s76
      %p88 = scmp.eq.s32.totalorder %s24, 1
      %p89 = por %p87, %p88
      %p91 = scmp.ne.s32.totalorder %s76, %s90
      %p92 = scmp.eq.s32.totalorder %s24, 0
      %p93 = por %p91, %p92
      %s95 = sadd.s32 %s94, 1
      %p98 = scmp.eq.s32.totalorder %s18, 1
      %p99 = scmp.ne.s32.totalorder %s94, %s96
      %p100 = scmp.eq.s32.totalorder %s18, 0
      %p101 = por %p99, %p100
      %p102 = scmp.ne.s32.totalorder %s94, %s96
      %p103 = scmp.eq.s32.totalorder %s23, 1
      %p104 = por %p102, %p103
      %p105 = scmp.ne.s32.totalorder %s96, %s97
      %p106 = scmp.eq.s32.totalorder %s23, 0
      %p107 = por %p105, %p106
      %p108 = scmp.ne.s32.totalorder %s96, %s97
      %p109 = scmp.eq.s32.totalorder %s24, 1
      %p110 = por %p108, %p109
      %p112 = scmp.ne.s32.totalorder %s97, %s111
      %p113 = scmp.eq.s32.totalorder %s24, 0
      %p114 = por %p112, %p113
      %s116 = sadd.s32 %s115, 1
      %p119 = scmp.eq.s32.totalorder %s18, 1
      %p120 = scmp.ne.s32.totalorder %s115, %s117
      %p121 = scmp.eq.s32.totalorder %s18, 0
      %p122 = por %p120, %p121
      %p123 = scmp.ne.s32.totalorder %s115, %s117
      %p124 = scmp.eq.s32.totalorder %s23, 1
      %p125 = por %p123, %p124
      %p126 = scmp.ne.s32.totalorder %s117, %s118
      %p127 = scmp.eq.s32.totalorder %s23, 0
      %p128 = por %p126, %p127
      %p129 = scmp.ne.s32.totalorder %s117, %s118
      %p130 = scmp.eq.s32.totalorder %s24, 1
      %p131 = por %p129, %p130
      %p133 = scmp.ne.s32.totalorder %s118, %s132
      %p134 = scmp.eq.s32.totalorder %s24, 0
      %p135 = por %p133, %p134
      %s136 = ssub.s32 %s18, %s25
      %p137 = scmp.eq.s32.totalorder %s136, 0
      %s139 = sadd.s32 %s138, 1
      %s140 = scalar_select %p137, %s138, %s139
      %p143 = pneg %p137
      %p144 = scmp.eq.s32.totalorder %s18, 1
      %p145 = por %p143, %p144
      %p146 = scmp.ne.s32.totalorder %s138, %s141
      %p147 = scmp.eq.s32.totalorder %s18, 0
      %p148 = por %p146, %p147
      %p149 = scmp.ne.s32.totalorder %s138, %s141
      %p150 = scmp.eq.s32.totalorder %s23, 1
      %p151 = por %p149, %p150
      %p152 = scmp.ne.s32.totalorder %s141, %s142
      %p153 = scmp.eq.s32.totalorder %s23, 0
      %p154 = por %p152, %p153
      %p155 = scmp.ne.s32.totalorder %s141, %s142
      %p156 = scmp.eq.s32.totalorder %s24, 1
      %p157 = por %p155, %p156
      %p159 = scmp.ne.s32.totalorder %s142, %s158
      %p160 = scmp.eq.s32.totalorder %s24, 0
      %p161 = por %p159, %p160
      %p162 = scmp.le.s32.totalorder 1, %s18
      %p163 = scmp.lt.s32.totalorder %s18, 3
      %p164 = pnand %p162, %p163
      %p165 = pneg %p164
      // Predicated region
      $region9: #{tpu_custom_call.1} parent=5 // pred_check
        _
      $region10: #{tpu_custom_call.1} parent=5 // pred_check_branch
        %167 = sbr.rel (%p164) target = $region12
      $region11: #{tpu_custom_call.1} parent=5 // pred_region
        %s168 = ssub.s32 %s18, 1
        // Predicated region
        $region13: #{tpu_custom_call.1} parent=11 // pred_check
          %p169 = pneg %p65
        $region14: #{tpu_custom_call.1} parent=11 // pred_check_branch
          %171 = sbr.rel (%p169) target = $region16
        $region15: #{tpu_custom_call.1} parent=11 // pred_region
          %s173 = ssub.s32 2048, 2048
          %174 = vsyncadd [#allocation6], %s173
          %s175 = sshll.u32 [#allocation5], 4
          %s176 = int_to_ptr.vmem [resolvable:$true] %s175
          %181 = dma.hbm_to_vmem [thread:$0]  %s1, 2048, %s176, [#allocation6], 64, 64, 4
        $region16: #{tpu_custom_call.1} parent=11 // pred_fallthru
          _
        // Predicated region
        $region17: #{tpu_custom_call.1} parent=11 // pred_check
          %p182 = pneg %p86
        $region18: #{tpu_custom_call.1} parent=11 // pred_check_branch
          %184 = sbr.rel (%p182) target = $region20
        $region19: #{tpu_custom_call.1} parent=11 // pred_region
          _
        $region20: #{tpu_custom_call.1} parent=11 // pred_fallthru
          _
        // Predicated region
        $region21: #{tpu_custom_call.1} parent=11 // pred_check
          %p185 = pneg %p107
        $region22: #{tpu_custom_call.1} parent=11 // pred_check_branch
          %187 = sbr.rel (%p185) target = $region24
        $region23: #{tpu_custom_call.1} parent=11 // pred_region
          _
        $region24: #{tpu_custom_call.1} parent=11 // pred_fallthru
          _
        // Predicated region
        $region25: #{tpu_custom_call.1} parent=11 // pred_check
          %p188 = pneg %p128
        $region26: #{tpu_custom_call.1} parent=11 // pred_check_branch
          %190 = sbr.rel (%p188) target = $region28
        $region27: #{tpu_custom_call.1} parent=11 // pred_region
          _
        $region28: #{tpu_custom_call.1} parent=11 // pred_fallthru
          _
      $region12: #{tpu_custom_call.1} parent=5 // pred_fallthru
        _
      %p191 = scmp.lt.s32.totalorder %s18, 2
      // Predicated region
      $region29: #{tpu_custom_call.1} parent=5 // pred_check
        %p192 = pneg %p191
      $region30: #{tpu_custom_call.1} parent=5 // pred_check_branch
        %194 = sbr.rel (%p192) target = $region32
      $region31: #{tpu_custom_call.1} parent=5 // pred_region
        // Predicated region
        $region33: #{tpu_custom_call.1} parent=31 // pred_check
          %p195 = pneg %p38
        $region34: #{tpu_custom_call.1} parent=31 // pred_check_branch
          %197 = sbr.rel (%p195) target = $region36
        $region35: #{tpu_custom_call.1} parent=31 // pred_region
          %s198 = sand.u32 %s28, 1
          %s199 = scalar_lea.sflag [#allocation3], %s198
          %s200 = sand.u32 %s28, 1
          %s201 = smul.addr %s200, 32
          %s202 = scalar_lea.vmem [#allocation2], %s201
          %s204 = ssub.s32 512, 512
          %205 = vsyncadd %s199, %s204
          %s206 = smul.addr %s18, 4
          %s207 = smul.addr %s206, 128
          %s208 = scalar_lea.hbm %s0, %s207
          %s209 = sshll.u32 %s202, 4
          %s210 = int_to_ptr.vmem [resolvable:$true] %s209
          %215 = dma.hbm_to_vmem [thread:$0]  %s208, 512, %s210, %s199, 128, 128, 8
        $region36: #{tpu_custom_call.1} parent=31 // pred_fallthru
          _
      $region32: #{tpu_custom_call.1} parent=5 // pred_fallthru
        _
      %p216 = scmp.le.s32.totalorder 1, %s18
      %p217 = scmp.lt.s32.totalorder %s18, 3
      %p218 = pnand %p216, %p217
      %p219 = pneg %p218
      // Predicated region
      $region37: #{tpu_custom_call.1} parent=5 // pred_check
        _
      $region38: #{tpu_custom_call.1} parent=5 // pred_check_branch
        %221 = sbr.rel (%p218) target = $region40
      $region39: #{tpu_custom_call.1} parent=5 // pred_region
        %s222 = ssub.s32 %s18, 1
        %s223 = sand.u32 %s31, 1
        %s224 = scalar_lea.sflag [#allocation3], %s223
        %s225 = sand.u32 %s31, 1
        %s226 = smul.addr %s225, 32
        %s227 = scalar_lea.vmem [#allocation2], %s226
        // Predicated region
        $region41: #{tpu_custom_call.1} parent=39 // pred_check
          %p228 = pneg %p44
        $region42: #{tpu_custom_call.1} parent=39 // pred_check_branch
          %230 = sbr.rel (%p228) target = $region44
        $region43: #{tpu_custom_call.1} parent=39 // pred_region
          %231 = dma.done %s224, 512
        $region44: #{tpu_custom_call.1} parent=39 // pred_fallthru
          _
        // Predicated region
        $region45: #{tpu_custom_call.1} parent=39 // pred_check
          %p232 = pneg %p65
        $region46: #{tpu_custom_call.1} parent=39 // pred_check_branch
          %234 = sbr.rel (%p232) target = $region48
        $region47: #{tpu_custom_call.1} parent=39 // pred_region
          %235 = dma.done [#allocation6], 2048
        $region48: #{tpu_custom_call.1} parent=39 // pred_fallthru
          _
        %s236 = sand.u32 %s31, 1
        %s237 = scalar_lea.sflag [#allocation3], %s236
        %s238 = sand.u32 %s31, 1
        %s239 = smul.addr %s238, 32
        %s240 = scalar_lea.vmem [#allocation2], %s239
        %p241 = pneg %p44
        %p242 = pneg %p41
        %p243 = pneg %p65
        %p244 = pneg %p62
        %p245 = pneg %p86
        %p246 = pneg %p83
        %p247 = pneg %p107
        %p248 = pneg %p104
        %p249 = pneg %p128
        %p250 = pneg %p125
        %p251 = pneg %p154
        %p252 = pneg %p151
        %s253 = sand.u32 %s141, 1
        %s254 = scalar_lea.sflag [#allocation4], %s253
        %s255 = sand.u32 %s141, 1
        %s256 = smul.addr %s255, 16
        %s257 = scalar_lea.vmem [#allocation7], %s256
        %v259 = vlaneseq
        %v260 = vshrl.u32 %v259, 7
        %v261 = vadd.s32 %v260, 8
        %v262 = vld [vmem:[%s227] sm:$0xff]
        %v263 = vld [vmem:[%s227 + $0x8] sm:$0xff]
        %v264 = vrot.slane %v262, 4
        %v265 = vrot.slane %v263, 4
        %vm266 = vcmp.lt.s32.totalorder %v260, 4
        %v267 = vsel %vm266, %v264, %v265
        %v268 = vsel %vm266, %v265, %v264
        %v269 = vadd.s32 %v260, 4294967292
        %v270 = vadd.s32 %v261, 4294967292
        %vm271 = vcmp.ge.s32.totalorder %v269, 0
        %vm272 = vcmp.ge.s32.totalorder %v270, 0
        %vm273 = vcmp.lt.s32.totalorder %v269, 16
        %vm274 = vcmp.lt.s32.totalorder %v270, 16
        %vm275 = vmand %vm271, %vm273
        %vm276 = vmand %vm272, %vm274
        %v277 = vsel %vm275, %v268, 0.0
        %v278 = vsel %vm276, %v267, 0.0
        %v279 = vpack.c.bf16 %v278, %v277
        %v280 = vld [vmem:[#allocation5] sm:$0xf]
        %v281 = vld [vmem:[#allocation5 + $0x4] sm:$0xf]
        %v282 = vrot.slane %v262, 5
        %v283 = vrot.slane %v263, 5
        %vm284 = vcmp.lt.s32.totalorder %v260, 3
        %v285 = vsel %vm284, %v282, %v283
        %v286 = vsel %vm284, %v283, %v282
        %v287 = vadd.s32 %v260, 4294967293
        %v288 = vadd.s32 %v261, 4294967293
        %vm289 = vcmp.ge.s32.totalorder %v287, 0
        %vm290 = vcmp.ge.s32.totalorder %v288, 0
        %vm291 = vcmp.lt.s32.totalorder %v287, 16
        %vm292 = vcmp.lt.s32.totalorder %v288, 16
        %vm293 = vmand %vm289, %vm291
        %vm294 = vmand %vm290, %vm292
        %v295 = vsel %vm293, %v286, 0.0
        %v296 = vsel %vm294, %v285, 0.0
        %v297 = vpack.c.bf16 %v296, %v295
        %s298 = scalar_lea.vmem [#allocation5], 8
        %v299 = vld [vmem:[%s298] sm:$0xf]
        %v300 = vld [vmem:[%s298 + $0x4] sm:$0xf]
        %v303 = vunpack.c.l.b16 %v299
        %v304 = vunpack.c.l.b16 %v300
        %v305 = vpack.c.b16 %v304, %v303
        %vm307 = vcmask 130048
        %v309 = vsel %vm307, %v297, 0
        %311 = vmatprep.subr.bf16.mxu0 0
        %312 = vmatpush1.bf16.msra.mxu0 %v305
        %313 = vmatprep.subr.bf16.mxu0 0
        %314 = vmatpush1.bf16.msra.mxu0 0
        %315 = vmatprep.subr.bf16.mxu0 0
        %316 = vmatpush1.bf16.msra.mxu0 0
        %317 = vmatprep.subr.bf16.mxu0 0
        %318 = vmatpush1.bf16.msra.mxu0 0
        %319 = vmatprep.subr.bf16.mxu0 0
        %320 = vmatpush1.bf16.msra.mxu0 0
        %321 = vmatprep.subr.bf16.mxu0 0
        %322 = vmatpush1.bf16.msra.mxu0 0
        %323 = vmatprep.subr.bf16.mxu0 0
        %324 = vmatpush1.bf16.msra.mxu0 0
        %325 = vmatprep.subr.bf16.mxu0 0
        %326 = vmatpush1.bf16.msra.mxu0 0
        %327 = vmatprep.subr.bf16.mxu0 0
        %328 = vmatpush1.bf16.msra.mxu0 0
        %329 = vmatprep.subr.bf16.mxu0 0
        %330 = vmatpush1.bf16.msra.mxu0 0
        %331 = vmatprep.subr.bf16.mxu0 0
        %332 = vmatpush1.bf16.msra.mxu0 0
        %333 = vmatprep.subr.bf16.mxu0 0
        %334 = vmatpush1.bf16.msra.mxu0 0
        %335 = vmatprep.subr.bf16.mxu0 0
        %336 = vmatpush1.bf16.msra.mxu0 0
        %337 = vmatprep.subr.bf16.mxu0 0
        %338 = vmatpush1.bf16.msra.mxu0 0
        %339 = vmatprep.subr.bf16.mxu0 0
        %340 = vmatpush1.bf16.msra.mxu0 0
        %341 = vmatprep.subr.bf16.mxu0 0
        %342 = vmatpush1.bf16.msra.mxu0 0
        %343 = vmatprep.mubr.bf16.mxu0 0
        %344 = vmatmul.mubr.bf16.gmra.mrb[0].mxu0 %v309
        %v345 = vpop.f32.mrb[0].mxu0
        %v346 = vadd.f32 0.0, %v345
        %v347 = vpop.f32.mrb[0].mxu0
        %v348 = vpop.f32.mrb[0].mxu0
        %v349 = vadd.f32 0.0, %v348
        %v350 = vpop.f32.mrb[0].mxu0
        %351 = vdwg.mxu0
        %v354 = vunpack.c.l.b16 %v280
        %v355 = vunpack.c.l.b16 %v281
        %v356 = vpack.c.b16 %v355, %v354
        %v359 = vsel %vm307, %v279, 0
        %361 = vmatprep.subr.bf16.mxu0 0
        %362 = vmatpush1.bf16.msra.mxu0 %v356
        %363 = vmatprep.subr.bf16.mxu0 0
        %364 = vmatpush1.bf16.msra.mxu0 0
        %365 = vmatprep.subr.bf16.mxu0 0
        %366 = vmatpush1.bf16.msra.mxu0 0
        %367 = vmatprep.subr.bf16.mxu0 0
        %368 = vmatpush1.bf16.msra.mxu0 0
        %369 = vmatprep.subr.bf16.mxu0 0
        %370 = vmatpush1.bf16.msra.mxu0 0
        %371 = vmatprep.subr.bf16.mxu0 0
        %372 = vmatpush1.bf16.msra.mxu0 0
        %373 = vmatprep.subr.bf16.mxu0 0
        %374 = vmatpush1.bf16.msra.mxu0 0
        %375 = vmatprep.subr.bf16.mxu0 0
        %376 = vmatpush1.bf16.msra.mxu0 0
        %377 = vmatprep.subr.bf16.mxu0 0
        %378 = vmatpush1.bf16.msra.mxu0 0
        %379 = vmatprep.subr.bf16.mxu0 0
        %380 = vmatpush1.bf16.msra.mxu0 0
        %381 = vmatprep.subr.bf16.mxu0 0
        %382 = vmatpush1.bf16.msra.mxu0 0
        %383 = vmatprep.subr.bf16.mxu0 0
        %384 = vmatpush1.bf16.msra.mxu0 0
        %385 = vmatprep.subr.bf16.mxu0 0
        %386 = vmatpush1.bf16.msra.mxu0 0
        %387 = vmatprep.subr.bf16.mxu0 0
        %388 = vmatpush1.bf16.msra.mxu0 0
        %389 = vmatprep.subr.bf16.mxu0 0
        %390 = vmatpush1.bf16.msra.mxu0 0
        %391 = vmatprep.subr.bf16.mxu0 0
        %392 = vmatpush1.bf16.msra.mxu0 0
        %393 = vmatprep.mubr.bf16.mxu0 0
        %394 = vmatmul.mubr.bf16.gmra.mrb[0].mxu0 %v359
        %v395 = vpop.f32.mrb[0].mxu0
        %v396 = vadd.f32 %v346, %v395
        %v397 = vpop.f32.mrb[0].mxu0
        %v398 = vpop.f32.mrb[0].mxu0
        %v399 = vadd.f32 %v349, %v398
        %v400 = vpop.f32.mrb[0].mxu0
        %401 = vdwg.mxu0
        %v402 = vrot.slane %v262, 6
        %v403 = vrot.slane %v263, 6
        %vm404 = vcmp.lt.s32.totalorder %v260, 2
        %v405 = vsel %vm404, %v402, %v403
        %v406 = vsel %vm404, %v403, %v402
        %v407 = vadd.s32 %v260, 4294967294
        %v408 = vadd.s32 %v261, 4294967294
        %vm409 = vcmp.ge.s32.totalorder %v407, 0
        %vm410 = vcmp.ge.s32.totalorder %v408, 0
        %vm411 = vcmp.lt.s32.totalorder %v407, 16
        %vm412 = vcmp.lt.s32.totalorder %v408, 16
        %vm413 = vmand %vm409, %vm411
        %vm414 = vmand %vm410, %vm412
        %v415 = vsel %vm413, %v406, 0.0
        %v416 = vsel %vm414, %v405, 0.0
        %v417 = vpack.c.bf16 %v416, %v415
        %s418 = scalar_lea.vmem [#allocation5], 16
        %v419 = vld [vmem:[%s418] sm:$0xf]
        %v420 = vld [vmem:[%s418 + $0x4] sm:$0xf]
        %v423 = vunpack.c.l.b16 %v419
        %v424 = vunpack.c.l.b16 %v420
        %v425 = vpack.c.b16 %v424, %v423
        %v428 = vsel %vm307, %v417, 0
        %430 = vmatprep.subr.bf16.mxu0 0
        %431 = vmatpush1.bf16.msra.mxu0 %v425
        %432 = vmatprep.subr.bf16.mxu0 0
        %433 = vmatpush1.bf16.msra.mxu0 0
        %434 = vmatprep.subr.bf16.mxu0 0
        %435 = vmatpush1.bf16.msra.mxu0 0
        %436 = vmatprep.subr.bf16.mxu0 0
        %437 = vmatpush1.bf16.msra.mxu0 0
        %438 = vmatprep.subr.bf16.mxu0 0
        %439 = vmatpush1.bf16.msra.mxu0 0
        %440 = vmatprep.subr.bf16.mxu0 0
        %441 = vmatpush1.bf16.msra.mxu0 0
        %442 = vmatprep.subr.bf16.mxu0 0
        %443 = vmatpush1.bf16.msra.mxu0 0
        %444 = vmatprep.subr.bf16.mxu0 0
        %445 = vmatpush1.bf16.msra.mxu0 0
        %446 = vmatprep.subr.bf16.mxu0 0
        %447 = vmatpush1.bf16.msra.mxu0 0
        %448 = vmatprep.subr.bf16.mxu0 0
        %449 = vmatpush1.bf16.msra.mxu0 0
        %450 = vmatprep.subr.bf16.mxu0 0
        %451 = vmatpush1.bf16.msra.mxu0 0
        %452 = vmatprep.subr.bf16.mxu0 0
        %453 = vmatpush1.bf16.msra.mxu0 0
        %454 = vmatprep.subr.bf16.mxu0 0
        %455 = vmatpush1.bf16.msra.mxu0 0
        %456 = vmatprep.subr.bf16.mxu0 0
        %457 = vmatpush1.bf16.msra.mxu0 0
        %458 = vmatprep.subr.bf16.mxu0 0
        %459 = vmatpush1.bf16.msra.mxu0 0
        %460 = vmatprep.subr.bf16.mxu0 0
        %461 = vmatpush1.bf16.msra.mxu0 0
        %462 = vmatprep.mubr.bf16.mxu0 0
        %463 = vmatmul.mubr.bf16.gmra.mrb[0].mxu0 %v428
        %v464 = vpop.f32.mrb[0].mxu0
        %v465 = vadd.f32 0.0, %v464
        %v466 = vpop.f32.mrb[0].mxu0
        %v467 = vpop.f32.mrb[0].mxu0
        %v468 = vadd.f32 0.0, %v467
        %v469 = vpop.f32.mrb[0].mxu0
        %470 = vdwg.mxu0
        %v471 = vadd.f32 %v396, %v465
        %v472 = vadd.f32 %v399, %v468
        %v473 = vrot.slane %v262, 7
        %v474 = vrot.slane %v263, 7
        %vm475 = vcmp.lt.s32.totalorder %v260, 1
        %v476 = vsel %vm475, %v473, %v474
        %v477 = vsel %vm475, %v474, %v473
        %v478 = vadd.s32 %v260, 4294967295
        %v479 = vadd.s32 %v261, 4294967295
        %vm480 = vcmp.ge.s32.totalorder %v478, 0
        %vm481 = vcmp.ge.s32.totalorder %v479, 0
        %vm482 = vcmp.lt.s32.totalorder %v478, 16
        %vm483 = vcmp.lt.s32.totalorder %v479, 16
        %vm484 = vmand %vm480, %vm482
        %vm485 = vmand %vm481, %vm483
        %v486 = vsel %vm484, %v477, 0.0
        %v487 = vsel %vm485, %v476, 0.0
        %v488 = vpack.c.bf16 %v487, %v486
        %s489 = scalar_lea.vmem [#allocation5], 24
        %v490 = vld [vmem:[%s489] sm:$0xf]
        %v491 = vld [vmem:[%s489 + $0x4] sm:$0xf]
        %v494 = vunpack.c.l.b16 %v490
        %v495 = vunpack.c.l.b16 %v491
        %v496 = vpack.c.b16 %v495, %v494
        %v499 = vsel %vm307, %v488, 0
        %501 = vmatprep.subr.bf16.mxu0 0
        %502 = vmatpush1.bf16.msra.mxu0 %v496
        %503 = vmatprep.subr.bf16.mxu0 0
        %504 = vmatpush1.bf16.msra.mxu0 0
        %505 = vmatprep.subr.bf16.mxu0 0
        %506 = vmatpush1.bf16.msra.mxu0 0
        %507 = vmatprep.subr.bf16.mxu0 0
        %508 = vmatpush1.bf16.msra.mxu0 0
        %509 = vmatprep.subr.bf16.mxu0 0
        %510 = vmatpush1.bf16.msra.mxu0 0
        %511 = vmatprep.subr.bf16.mxu0 0
        %512 = vmatpush1.bf16.msra.mxu0 0
        %513 = vmatprep.subr.bf16.mxu0 0
        %514 = vmatpush1.bf16.msra.mxu0 0
        %515 = vmatprep.subr.bf16.mxu0 0
        %516 = vmatpush1.bf16.msra.mxu0 0
        %517 = vmatprep.subr.bf16.mxu0 0
        %518 = vmatpush1.bf16.msra.mxu0 0
        %519 = vmatprep.subr.bf16.mxu0 0
        %520 = vmatpush1.bf16.msra.mxu0 0
        %521 = vmatprep.subr.bf16.mxu0 0
        %522 = vmatpush1.bf16.msra.mxu0 0
        %523 = vmatprep.subr.bf16.mxu0 0
        %524 = vmatpush1.bf16.msra.mxu0 0
        %525 = vmatprep.subr.bf16.mxu0 0
        %526 = vmatpush1.bf16.msra.mxu0 0
        %527 = vmatprep.subr.bf16.mxu0 0
        %528 = vmatpush1.bf16.msra.mxu0 0
        %529 = vmatprep.subr.bf16.mxu0 0
        %530 = vmatpush1.bf16.msra.mxu0 0
        %531 = vmatprep.subr.bf16.mxu0 0
        %532 = vmatpush1.bf16.msra.mxu0 0
        %533 = vmatprep.mubr.bf16.mxu0 0
        %534 = vmatmul.mubr.bf16.gmra.mrb[0].mxu0 %v499
        %v535 = vpop.f32.mrb[0].mxu0
        %v536 = vadd.f32 0.0, %v535
        %v537 = vpop.f32.mrb[0].mxu0
        %v538 = vpop.f32.mrb[0].mxu0
        %v539 = vadd.f32 0.0, %v538
        %v540 = vpop.f32.mrb[0].mxu0
        %541 = vdwg.mxu0
        %v542 = vadd.f32 %v471, %v536
        %v543 = vadd.f32 %v472, %v539
        %vm544 = vcmp.ge.s32.totalorder %v260, 0
        %vm545 = vcmp.ge.s32.totalorder %v261, 0
        %vm546 = vcmp.lt.s32.totalorder %v260, 16
        %vm547 = vcmp.lt.s32.totalorder %v261, 16
        %vm548 = vmand %vm544, %vm546
        %vm549 = vmand %vm545, %vm547
        %v550 = vsel %vm548, %v262, 0.0
        %v551 = vsel %vm549, %v263, 0.0
        %v552 = vpack.c.bf16 %v551, %v550
        %s553 = scalar_lea.vmem [#allocation5], 32
        %v554 = vld [vmem:[%s553] sm:$0xf]
        %v555 = vld [vmem:[%s553 + $0x4] sm:$0xf]
        %v558 = vunpack.c.l.b16 %v554
        %v559 = vunpack.c.l.b16 %v555
        %v560 = vpack.c.b16 %v559, %v558
        %v563 = vsel %vm307, %v552, 0
        %565 = vmatprep.subr.bf16.mxu0 0
        %566 = vmatpush1.bf16.msra.mxu0 %v560
        %567 = vmatprep.subr.bf16.mxu0 0
        %568 = vmatpush1.bf16.msra.mxu0 0
        %569 = vmatprep.subr.bf16.mxu0 0
        %570 = vmatpush1.bf16.msra.mxu0 0
        %571 = vmatprep.subr.bf16.mxu0 0
        %572 = vmatpush1.bf16.msra.mxu0 0
        %573 = vmatprep.subr.bf16.mxu0 0
        %574 = vmatpush1.bf16.msra.mxu0 0
        %575 = vmatprep.subr.bf16.mxu0 0
        %576 = vmatpush1.bf16.msra.mxu0 0
        %577 = vmatprep.subr.bf16.mxu0 0
        %578 = vmatpush1.bf16.msra.mxu0 0
        %579 = vmatprep.subr.bf16.mxu0 0
        %580 = vmatpush1.bf16.msra.mxu0 0
        %581 = vmatprep.subr.bf16.mxu0 0
        %582 = vmatpush1.bf16.msra.mxu0 0
        %583 = vmatprep.subr.bf16.mxu0 0
        %584 = vmatpush1.bf16.msra.mxu0 0
        %585 = vmatprep.subr.bf16.mxu0 0
        %586 = vmatpush1.bf16.msra.mxu0 0
        %587 = vmatprep.subr.bf16.mxu0 0
        %588 = vmatpush1.bf16.msra.mxu0 0
        %589 = vmatprep.subr.bf16.mxu0 0
        %590 = vmatpush1.bf16.msra.mxu0 0
        %591 = vmatprep.subr.bf16.mxu0 0
        %592 = vmatpush1.bf16.msra.mxu0 0
        %593 = vmatprep.subr.bf16.mxu0 0
        %594 = vmatpush1.bf16.msra.mxu0 0
        %595 = vmatprep.subr.bf16.mxu0 0
        %596 = vmatpush1.bf16.msra.mxu0 0
        %597 = vmatprep.mubr.bf16.mxu0 0
        %598 = vmatmul.mubr.bf16.gmra.mrb[0].mxu0 %v563
        %v599 = vpop.f32.mrb[0].mxu0
        %v600 = vadd.f32 0.0, %v599
        %v601 = vpop.f32.mrb[0].mxu0
        %v602 = vpop.f32.mrb[0].mxu0
        %v603 = vadd.f32 0.0, %v602
        %v604 = vpop.f32.mrb[0].mxu0
        %605 = vdwg.mxu0
        %v606 = vadd.f32 %v542, %v600
        %v607 = vadd.f32 %v543, %v603
        %v608 = vrot.slane %v262, 1
        %v609 = vrot.slane %v263, 1
        %vm610 = vcmp.lt.s32.totalorder %v260, 7
        %v611 = vsel %vm610, %v608, %v609
        %v612 = vsel %vm610, %v609, %v608
        %v613 = vadd.s32 %v260, 1
        %v614 = vadd.s32 %v261, 1
        %vm615 = vcmp.ge.s32.totalorder %v613, 0
        %vm616 = vcmp.ge.s32.totalorder %v614, 0
        %vm617 = vcmp.lt.s32.totalorder %v613, 16
        %vm618 = vcmp.lt.s32.totalorder %v614, 16
        %vm619 = vmand %vm615, %vm617
        %vm620 = vmand %vm616, %vm618
        %v621 = vsel %vm619, %v611, 0.0
        %v622 = vsel %vm620, %v612, 0.0
        %v623 = vpack.c.bf16 %v622, %v621
        %s624 = scalar_lea.vmem [#allocation5], 40
        %v625 = vld [vmem:[%s624] sm:$0xf]
        %v626 = vld [vmem:[%s624 + $0x4] sm:$0xf]
        %v629 = vunpack.c.l.b16 %v625
        %v630 = vunpack.c.l.b16 %v626
        %v631 = vpack.c.b16 %v630, %v629
        %v634 = vsel %vm307, %v623, 0
        %636 = vmatprep.subr.bf16.mxu0 0
        %637 = vmatpush1.bf16.msra.mxu0 %v631
        %638 = vmatprep.subr.bf16.mxu0 0
        %639 = vmatpush1.bf16.msra.mxu0 0
        %640 = vmatprep.subr.bf16.mxu0 0
        %641 = vmatpush1.bf16.msra.mxu0 0
        %642 = vmatprep.subr.bf16.mxu0 0
        %643 = vmatpush1.bf16.msra.mxu0 0
        %644 = vmatprep.subr.bf16.mxu0 0
        %645 = vmatpush1.bf16.msra.mxu0 0
        %646 = vmatprep.subr.bf16.mxu0 0
        %647 = vmatpush1.bf16.msra.mxu0 0
        %648 = vmatprep.subr.bf16.mxu0 0
        %649 = vmatpush1.bf16.msra.mxu0 0
        %650 = vmatprep.subr.bf16.mxu0 0
        %651 = vmatpush1.bf16.msra.mxu0 0
        %652 = vmatprep.subr.bf16.mxu0 0
        %653 = vmatpush1.bf16.msra.mxu0 0
        %654 = vmatprep.subr.bf16.mxu0 0
        %655 = vmatpush1.bf16.msra.mxu0 0
        %656 = vmatprep.subr.bf16.mxu0 0
        %657 = vmatpush1.bf16.msra.mxu0 0
        %658 = vmatprep.subr.bf16.mxu0 0
        %659 = vmatpush1.bf16.msra.mxu0 0
        %660 = vmatprep.subr.bf16.mxu0 0
        %661 = vmatpush1.bf16.msra.mxu0 0
        %662 = vmatprep.subr.bf16.mxu0 0
        %663 = vmatpush1.bf16.msra.mxu0 0
        %664 = vmatprep.subr.bf16.mxu0 0
        %665 = vmatpush1.bf16.msra.mxu0 0
        %666 = vmatprep.subr.bf16.mxu0 0
        %667 = vmatpush1.bf16.msra.mxu0 0
        %668 = vmatprep.mubr.bf16.mxu0 0
        %669 = vmatmul.mubr.bf16.gmra.mrb[0].mxu0 %v634
        %v670 = vpop.f32.mrb[0].mxu0
        %v671 = vadd.f32 0.0, %v670
        %v672 = vpop.f32.mrb[0].mxu0
        %v673 = vpop.f32.mrb[0].mxu0
        %v674 = vadd.f32 0.0, %v673
        %v675 = vpop.f32.mrb[0].mxu0
        %676 = vdwg.mxu0
        %v677 = vadd.f32 %v606, %v671
        %v678 = vadd.f32 %v607, %v674
        %v679 = vrot.slane %v262, 2
        %v680 = vrot.slane %v263, 2
        %vm681 = vcmp.lt.s32.totalorder %v260, 6
        %v682 = vsel %vm681, %v679, %v680
        %v683 = vsel %vm681, %v680, %v679
        %v684 = vadd.s32 %v260, 2
        %v685 = vadd.s32 %v261, 2
        %vm686 = vcmp.ge.s32.totalorder %v684, 0
        %vm687 = vcmp.ge.s32.totalorder %v685, 0
        %vm688 = vcmp.lt.s32.totalorder %v684, 16
        %vm689 = vcmp.lt.s32.totalorder %v685, 16
        %vm690 = vmand %vm686, %vm688
        %vm691 = vmand %vm687, %vm689
        %v692 = vsel %vm690, %v682, 0.0
        %v693 = vsel %vm691, %v683, 0.0
        %v694 = vpack.c.bf16 %v693, %v692
        %s695 = scalar_lea.vmem [#allocation5], 48
        %v696 = vld [vmem:[%s695] sm:$0xf]
        %v697 = vld [vmem:[%s695 + $0x4] sm:$0xf]
        %v700 = vunpack.c.l.b16 %v696
        %v701 = vunpack.c.l.b16 %v697
        %v702 = vpack.c.b16 %v701, %v700
        %v705 = vsel %vm307, %v694, 0
        %707 = vmatprep.subr.bf16.mxu0 0
        %708 = vmatpush1.bf16.msra.mxu0 %v702
        %709 = vmatprep.subr.bf16.mxu0 0
        %710 = vmatpush1.bf16.msra.mxu0 0
        %711 = vmatprep.subr.bf16.mxu0 0
        %712 = vmatpush1.bf16.msra.mxu0 0
        %713 = vmatprep.subr.bf16.mxu0 0
        %714 = vmatpush1.bf16.msra.mxu0 0
        %715 = vmatprep.subr.bf16.mxu0 0
        %716 = vmatpush1.bf16.msra.mxu0 0
        %717 = vmatprep.subr.bf16.mxu0 0
        %718 = vmatpush1.bf16.msra.mxu0 0
        %719 = vmatprep.subr.bf16.mxu0 0
        %720 = vmatpush1.bf16.msra.mxu0 0
        %721 = vmatprep.subr.bf16.mxu0 0
        %722 = vmatpush1.bf16.msra.mxu0 0
        %723 = vmatprep.subr.bf16.mxu0 0
        %724 = vmatpush1.bf16.msra.mxu0 0
        %725 = vmatprep.subr.bf16.mxu0 0
        %726 = vmatpush1.bf16.msra.mxu0 0
        %727 = vmatprep.subr.bf16.mxu0 0
        %728 = vmatpush1.bf16.msra.mxu0 0
        %729 = vmatprep.subr.bf16.mxu0 0
        %730 = vmatpush1.bf16.msra.mxu0 0
        %731 = vmatprep.subr.bf16.mxu0 0
        %732 = vmatpush1.bf16.msra.mxu0 0
        %733 = vmatprep.subr.bf16.mxu0 0
        %734 = vmatpush1.bf16.msra.mxu0 0
        %735 = vmatprep.subr.bf16.mxu0 0
        %736 = vmatpush1.bf16.msra.mxu0 0
        %737 = vmatprep.subr.bf16.mxu0 0
        %738 = vmatpush1.bf16.msra.mxu0 0
        %739 = vmatprep.mubr.bf16.mxu0 0
        %740 = vmatmul.mubr.bf16.gmra.mrb[0].mxu0 %v705
        %v741 = vpop.f32.mrb[0].mxu0
        %v742 = vadd.f32 0.0, %v741
        %v743 = vpop.f32.mrb[0].mxu0
        %v744 = vpop.f32.mrb[0].mxu0
        %v745 = vadd.f32 0.0, %v744
        %v746 = vpop.f32.mrb[0].mxu0
        %747 = vdwg.mxu0
        %v748 = vadd.f32 %v677, %v742
        %v749 = vadd.f32 %v678, %v745
        %v750 = vrot.slane %v262, 3
        %v751 = vrot.slane %v263, 3
        %vm752 = vcmp.lt.s32.totalorder %v260, 5
        %v753 = vsel %vm752, %v750, %v751
        %v754 = vsel %vm752, %v751, %v750
        %v755 = vadd.s32 %v260, 3
        %v756 = vadd.s32 %v261, 3
        %vm757 = vcmp.ge.s32.totalorder %v755, 0
        %vm758 = vcmp.ge.s32.totalorder %v756, 0
        %vm759 = vcmp.lt.s32.totalorder %v755, 16
        %vm760 = vcmp.lt.s32.totalorder %v756, 16
        %vm761 = vmand %vm757, %vm759
        %vm762 = vmand %vm758, %vm760
        %v763 = vsel %vm761, %v753, 0.0
        %v764 = vsel %vm762, %v754, 0.0
        %v765 = vpack.c.bf16 %v764, %v763
        %s766 = scalar_lea.vmem [#allocation5], 56
        %v767 = vld [vmem:[%s766] sm:$0xf]
        %v768 = vld [vmem:[%s766 + $0x4] sm:$0xf]
        %v771 = vunpack.c.l.b16 %v767
        %v772 = vunpack.c.l.b16 %v768
        %v773 = vpack.c.b16 %v772, %v771
        %v776 = vsel %vm307, %v765, 0
        %778 = vmatprep.subr.bf16.mxu0 0
        %779 = vmatpush1.bf16.msra.mxu0 %v773
        %780 = vmatprep.subr.bf16.mxu0 0
        %781 = vmatpush1.bf16.msra.mxu0 0
        %782 = vmatprep.subr.bf16.mxu0 0
        %783 = vmatpush1.bf16.msra.mxu0 0
        %784 = vmatprep.subr.bf16.mxu0 0
        %785 = vmatpush1.bf16.msra.mxu0 0
        %786 = vmatprep.subr.bf16.mxu0 0
        %787 = vmatpush1.bf16.msra.mxu0 0
        %788 = vmatprep.subr.bf16.mxu0 0
        %789 = vmatpush1.bf16.msra.mxu0 0
        %790 = vmatprep.subr.bf16.mxu0 0
        %791 = vmatpush1.bf16.msra.mxu0 0
        %792 = vmatprep.subr.bf16.mxu0 0
        %793 = vmatpush1.bf16.msra.mxu0 0
        %794 = vmatprep.subr.bf16.mxu0 0
        %795 = vmatpush1.bf16.msra.mxu0 0
        %796 = vmatprep.subr.bf16.mxu0 0
        %797 = vmatpush1.bf16.msra.mxu0 0
        %798 = vmatprep.subr.bf16.mxu0 0
        %799 = vmatpush1.bf16.msra.mxu0 0
        %800 = vmatprep.subr.bf16.mxu0 0
        %801 = vmatpush1.bf16.msra.mxu0 0
        %802 = vmatprep.subr.bf16.mxu0 0
        %803 = vmatpush1.bf16.msra.mxu0 0
        %804 = vmatprep.subr.bf16.mxu0 0
        %805 = vmatpush1.bf16.msra.mxu0 0
        %806 = vmatprep.subr.bf16.mxu0 0
        %807 = vmatpush1.bf16.msra.mxu0 0
        %808 = vmatprep.subr.bf16.mxu0 0
        %809 = vmatpush1.bf16.msra.mxu0 0
        %810 = vmatprep.mubr.bf16.mxu0 0
        %811 = vmatmul.mubr.bf16.gmra.mrb[0].mxu0 %v776
        %v812 = vpop.f32.mrb[0].mxu0
        %v813 = vadd.f32 0.0, %v812
        %v814 = vpop.f32.mrb[0].mxu0
        %v815 = vpop.f32.mrb[0].mxu0
        %v816 = vadd.f32 0.0, %v815
        %v817 = vpop.f32.mrb[0].mxu0
        %818 = vdwg.mxu0
        %v819 = vadd.f32 %v748, %v813
        %v820 = vadd.f32 %v749, %v816
        %v821 = vld [vmem:[%s2] sm:$0x1]
        %v823 = vlaneseq
        %v824 = vshrl.u32 %v823, 7
        %v825 = vsub.s32 0, %v824
        %v826 = vrot.slane %v821, %v825
        %v828 = vadd.f32 %v819, %v826
        %v829 = vadd.f32 %v820, %v826
        %v830 = vmul.f32 %v828, 0.5
        %v831 = vmul.f32 %v829, 0.5
        %v832 = vrcp.pop 1.4142135
        %v833 = vmul.f32 %v828, %v832
        %v834 = vmul.f32 %v829, %v832
        %v835 = verf.f32.pop %v833
        %v836 = verf.f32.pop %v834
        %v837 = vadd.f32 %v835, 1.0
        %v838 = vadd.f32 %v836, 1.0
        %v839 = vmul.f32 %v830, %v837
        %v840 = vmul.f32 %v831, %v838
        %s841 = scalar_lea.vmem %s227, 16 [#allocation2]
        %v842 = vld [vmem:[%s841] sm:$0xff]
        %v843 = vld [vmem:[%s841 + $0x8] sm:$0xff]
        %v844 = vrot.slane %v842, 4
        %v845 = vrot.slane %v843, 4
        %v846 = vsel %vm266, %v844, %v845
        %v847 = vsel %vm266, %v845, %v844
        %v848 = vsel %vm275, %v847, 0.0
        %v849 = vsel %vm276, %v846, 0.0
        %v850 = vpack.c.bf16 %v849, %v848
        %s851 = scalar_lea.vmem [#allocation5], 64
        %v852 = vld [vmem:[%s851] sm:$0xf]
        %v853 = vld [vmem:[%s851 + $0x4] sm:$0xf]
        %v854 = vrot.slane %v842, 5
        %v855 = vrot.slane %v843, 5
        %v856 = vsel %vm284, %v854, %v855
        %v857 = vsel %vm284, %v855, %v854
        %v858 = vsel %vm293, %v857, 0.0
        %v859 = vsel %vm294, %v856, 0.0
        %v860 = vpack.c.bf16 %v859, %v858
        %s861 = scalar_lea.vmem [#allocation5], 72
        %v862 = vld [vmem:[%s861] sm:$0xf]
        %v863 = vld [vmem:[%s861 + $0x4] sm:$0xf]
        %v866 = vunpack.c.l.b16 %v862
        %v867 = vunpack.c.l.b16 %v863
        %v868 = vpack.c.b16 %v867, %v866
        %v871 = vsel %vm307, %v860, 0
        %873 = vmatprep.subr.bf16.mxu0 0
        %874 = vmatpush1.bf16.msra.mxu0 %v868
        %875 = vmatprep.subr.bf16.mxu0 0
        %876 = vmatpush1.bf16.msra.mxu0 0
        %877 = vmatprep.subr.bf16.mxu0 0
        %878 = vmatpush1.bf16.msra.mxu0 0
        %879 = vmatprep.subr.bf16.mxu0 0
        %880 = vmatpush1.bf16.msra.mxu0 0
        %881 = vmatprep.subr.bf16.mxu0 0
        %882 = vmatpush1.bf16.msra.mxu0 0
        %883 = vmatprep.subr.bf16.mxu0 0
        %884 = vmatpush1.bf16.msra.mxu0 0
        %885 = vmatprep.subr.bf16.mxu0 0
        %886 = vmatpush1.bf16.msra.mxu0 0
        %887 = vmatprep.subr.bf16.mxu0 0
        %888 = vmatpush1.bf16.msra.mxu0 0
        %889 = vmatprep.subr.bf16.mxu0 0
        %890 = vmatpush1.bf16.msra.mxu0 0
        %891 = vmatprep.subr.bf16.mxu0 0
        %892 = vmatpush1.bf16.msra.mxu0 0
        %893 = vmatprep.subr.bf16.mxu0 0
        %894 = vmatpush1.bf16.msra.mxu0 0
        %895 = vmatprep.subr.bf16.mxu0 0
        %896 = vmatpush1.bf16.msra.mxu0 0
        %897 = vmatprep.subr.bf16.mxu0 0
        %898 = vmatpush1.bf16.msra.mxu0 0
        %899 = vmatprep.subr.bf16.mxu0 0
        %900 = vmatpush1.bf16.msra.mxu0 0
        %901 = vmatprep.subr.bf16.mxu0 0
        %902 = vmatpush1.bf16.msra.mxu0 0
        %903 = vmatprep.subr.bf16.mxu0 0
        %904 = vmatpush1.bf16.msra.mxu0 0
        %905 = vmatprep.mubr.bf16.mxu0 0
        %906 = vmatmul.mubr.bf16.gmra.mrb[0].mxu0 %v871
        %v907 = vpop.f32.mrb[0].mxu0
        %v908 = vadd.f32 0.0, %v907
        %v909 = vpop.f32.mrb[0].mxu0
        %v910 = vpop.f32.mrb[0].mxu0
        %v911 = vadd.f32 0.0, %v910
        %v912 = vpop.f32.mrb[0].mxu0
        %913 = vdwg.mxu0
        %v916 = vunpack.c.l.b16 %v852
        %v917 = vunpack.c.l.b16 %v853
        %v918 = vpack.c.b16 %v917, %v916
        %v921 = vsel %vm307, %v850, 0
        %923 = vmatprep.subr.bf16.mxu0 0
        %924 = vmatpush1.bf16.msra.mxu0 %v918
        %925 = vmatprep.subr.bf16.mxu0 0
        %926 = vmatpush1.bf16.msra.mxu0 0
        %927 = vmatprep.subr.bf16.mxu0 0
        %928 = vmatpush1.bf16.msra.mxu0 0
        %929 = vmatprep.subr.bf16.mxu0 0
        %930 = vmatpush1.bf16.msra.mxu0 0
        %931 = vmatprep.subr.bf16.mxu0 0
        %932 = vmatpush1.bf16.msra.mxu0 0
        %933 = vmatprep.subr.bf16.mxu0 0
        %934 = vmatpush1.bf16.msra.mxu0 0
        %935 = vmatprep.subr.bf16.mxu0 0
        %936 = vmatpush1.bf16.msra.mxu0 0
        %937 = vmatprep.subr.bf16.mxu0 0
        %938 = vmatpush1.bf16.msra.mxu0 0
        %939 = vmatprep.subr.bf16.mxu0 0
        %940 = vmatpush1.bf16.msra.mxu0 0
        %941 = vmatprep.subr.bf16.mxu0 0
        %942 = vmatpush1.bf16.msra.mxu0 0
        %943 = vmatprep.subr.bf16.mxu0 0
        %944 = vmatpush1.bf16.msra.mxu0 0
        %945 = vmatprep.subr.bf16.mxu0 0
        %946 = vmatpush1.bf16.msra.mxu0 0
        %947 = vmatprep.subr.bf16.mxu0 0
        %948 = vmatpush1.bf16.msra.mxu0 0
        %949 = vmatprep.subr.bf16.mxu0 0
        %950 = vmatpush1.bf16.msra.mxu0 0
        %951 = vmatprep.subr.bf16.mxu0 0
        %952 = vmatpush1.bf16.msra.mxu0 0
        %953 = vmatprep.subr.bf16.mxu0 0
        %954 = vmatpush1.bf16.msra.mxu0 0
        %955 = vmatprep.mubr.bf16.mxu0 0
        %956 = vmatmul.mubr.bf16.gmra.mrb[0].mxu0 %v921
        %v957 = vpop.f32.mrb[0].mxu0
        %v958 = vadd.f32 %v908, %v957
        %v959 = vpop.f32.mrb[0].mxu0
        %v960 = vpop.f32.mrb[0].mxu0
        %v961 = vadd.f32 %v911, %v960
        %v962 = vpop.f32.mrb[0].mxu0
        %963 = vdwg.mxu0
        %v964 = vrot.slane %v842, 6
        %v965 = vrot.slane %v843, 6
        %v966 = vsel %vm404, %v964, %v965
        %v967 = vsel %vm404, %v965, %v964
        %v968 = vsel %vm413, %v967, 0.0
        %v969 = vsel %vm414, %v966, 0.0
        %v970 = vpack.c.bf16 %v969, %v968
        %s971 = scalar_lea.vmem [#allocation5], 80
        %v972 = vld [vmem:[%s971] sm:$0xf]
        %v973 = vld [vmem:[%s971 + $0x4] sm:$0xf]
        %v976 = vunpack.c.l.b16 %v972
        %v977 = vunpack.c.l.b16 %v973
        %v978 = vpack.c.b16 %v977, %v976
        %v981 = vsel %vm307, %v970, 0
        %983 = vmatprep.subr.bf16.mxu0 0
        %984 = vmatpush1.bf16.msra.mxu0 %v978
        %985 = vmatprep.subr.bf16.mxu0 0
        %986 = vmatpush1.bf16.msra.mxu0 0
        %987 = vmatprep.subr.bf16.mxu0 0
        %988 = vmatpush1.bf16.msra.mxu0 0
        %989 = vmatprep.subr.bf16.mxu0 0
        %990 = vmatpush1.bf16.msra.mxu0 0
        %991 = vmatprep.subr.bf16.mxu0 0
        %992 = vmatpush1.bf16.msra.mxu0 0
        %993 = vmatprep.subr.bf16.mxu0 0
        %994 = vmatpush1.bf16.msra.mxu0 0
        %995 = vmatprep.subr.bf16.mxu0 0
        %996 = vmatpush1.bf16.msra.mxu0 0
        %997 = vmatprep.subr.bf16.mxu0 0
        %998 = vmatpush1.bf16.msra.mxu0 0
        %999 = vmatprep.subr.bf16.mxu0 0
        %1000 = vmatpush1.bf16.msra.mxu0 0
        %1001 = vmatprep.subr.bf16.mxu0 0
        %1002 = vmatpush1.bf16.msra.mxu0 0
        %1003 = vmatprep.subr.bf16.mxu0 0
        %1004 = vmatpush1.bf16.msra.mxu0 0
        %1005 = vmatprep.subr.bf16.mxu0 0
        %1006 = vmatpush1.bf16.msra.mxu0 0
        %1007 = vmatprep.subr.bf16.mxu0 0
        %1008 = vmatpush1.bf16.msra.mxu0 0
        %1009 = vmatprep.subr.bf16.mxu0 0
        %1010 = vmatpush1.bf16.msra.mxu0 0
        %1011 = vmatprep.subr.bf16.mxu0 0
        %1012 = vmatpush1.bf16.msra.mxu0 0
        %1013 = vmatprep.subr.bf16.mxu0 0
        %1014 = vmatpush1.bf16.msra.mxu0 0
        %1015 = vmatprep.mubr.bf16.mxu0 0
        %1016 = vmatmul.mubr.bf16.gmra.mrb[0].mxu0 %v981
        %v1017 = vpop.f32.mrb[0].mxu0
        %v1018 = vadd.f32 0.0, %v1017
        %v1019 = vpop.f32.mrb[0].mxu0
        %v1020 = vpop.f32.mrb[0].mxu0
        %v1021 = vadd.f32 0.0, %v1020
        %v1022 = vpop.f32.mrb[0].mxu0
        %1023 = vdwg.mxu0
        %v1024 = vadd.f32 %v958, %v1018
        %v1025 = vadd.f32 %v961, %v1021
        %v1026 = vrot.slane %v842, 7
        %v1027 = vrot.slane %v843, 7
        %v1028 = vsel %vm475, %v1026, %v1027
        %v1029 = vsel %vm475, %v1027, %v1026
        %v1030 = vsel %vm484, %v1029, 0.0
        %v1031 = vsel %vm485, %v1028, 0.0
        %v1032 = vpack.c.bf16 %v1031, %v1030
        %s1033 = scalar_lea.vmem [#allocation5], 88
        %v1034 = vld [vmem:[%s1033] sm:$0xf]
        %v1035 = vld [vmem:[%s1033 + $0x4] sm:$0xf]
        %v1038 = vunpack.c.l.b16 %v1034
        %v1039 = vunpack.c.l.b16 %v1035
        %v1040 = vpack.c.b16 %v1039, %v1038
        %v1043 = vsel %vm307, %v1032, 0
        %1045 = vmatprep.subr.bf16.mxu0 0
        %1046 = vmatpush1.bf16.msra.mxu0 %v1040
        %1047 = vmatprep.subr.bf16.mxu0 0
        %1048 = vmatpush1.bf16.msra.mxu0 0
        %1049 = vmatprep.subr.bf16.mxu0 0
        %1050 = vmatpush1.bf16.msra.mxu0 0
        %1051 = vmatprep.subr.bf16.mxu0 0
        %1052 = vmatpush1.bf16.msra.mxu0 0
        %1053 = vmatprep.subr.bf16.mxu0 0
        %1054 = vmatpush1.bf16.msra.mxu0 0
        %1055 = vmatprep.subr.bf16.mxu0 0
        %1056 = vmatpush1.bf16.msra.mxu0 0
        %1057 = vmatprep.subr.bf16.mxu0 0
        %1058 = vmatpush1.bf16.msra.mxu0 0
        %1059 = vmatprep.subr.bf16.mxu0 0
        %1060 = vmatpush1.bf16.msra.mxu0 0
        %1061 = vmatprep.subr.bf16.mxu0 0
        %1062 = vmatpush1.bf16.msra.mxu0 0
        %1063 = vmatprep.subr.bf16.mxu0 0
        %1064 = vmatpush1.bf16.msra.mxu0 0
        %1065 = vmatprep.subr.bf16.mxu0 0
        %1066 = vmatpush1.bf16.msra.mxu0 0
        %1067 = vmatprep.subr.bf16.mxu0 0
        %1068 = vmatpush1.bf16.msra.mxu0 0
        %1069 = vmatprep.subr.bf16.mxu0 0
        %1070 = vmatpush1.bf16.msra.mxu0 0
        %1071 = vmatprep.subr.bf16.mxu0 0
        %1072 = vmatpush1.bf16.msra.mxu0 0
        %1073 = vmatprep.subr.bf16.mxu0 0
        %1074 = vmatpush1.bf16.msra.mxu0 0
        %1075 = vmatprep.subr.bf16.mxu0 0
        %1076 = vmatpush1.bf16.msra.mxu0 0
        %1077 = vmatprep.mubr.bf16.mxu0 0
        %1078 = vmatmul.mubr.bf16.gmra.mrb[0].mxu0 %v1043
        %v1079 = vpop.f32.mrb[0].mxu0
        %v1080 = vadd.f32 0.0, %v1079
        %v1081 = vpop.f32.mrb[0].mxu0
        %v1082 = vpop.f32.mrb[0].mxu0
        %v1083 = vadd.f32 0.0, %v1082
        %v1084 = vpop.f32.mrb[0].mxu0
        %1085 = vdwg.mxu0
        %v1086 = vadd.f32 %v1024, %v1080
        %v1087 = vadd.f32 %v1025, %v1083
        %v1088 = vsel %vm548, %v842, 0.0
        %v1089 = vsel %vm549, %v843, 0.0
        %v1090 = vpack.c.bf16 %v1089, %v1088
        %s1091 = scalar_lea.vmem [#allocation5], 96
        %v1092 = vld [vmem:[%s1091] sm:$0xf]
        %v1093 = vld [vmem:[%s1091 + $0x4] sm:$0xf]
        %v1096 = vunpack.c.l.b16 %v1092
        %v1097 = vunpack.c.l.b16 %v1093
        %v1098 = vpack.c.b16 %v1097, %v1096
        %v1101 = vsel %vm307, %v1090, 0
        %1103 = vmatprep.subr.bf16.mxu0 0
        %1104 = vmatpush1.bf16.msra.mxu0 %v1098
        %1105 = vmatprep.subr.bf16.mxu0 0
        %1106 = vmatpush1.bf16.msra.mxu0 0
        %1107 = vmatprep.subr.bf16.mxu0 0
        %1108 = vmatpush1.bf16.msra.mxu0 0
        %1109 = vmatprep.subr.bf16.mxu0 0
        %1110 = vmatpush1.bf16.msra.mxu0 0
        %1111 = vmatprep.subr.bf16.mxu0 0
        %1112 = vmatpush1.bf16.msra.mxu0 0
        %1113 = vmatprep.subr.bf16.mxu0 0
        %1114 = vmatpush1.bf16.msra.mxu0 0
        %1115 = vmatprep.subr.bf16.mxu0 0
        %1116 = vmatpush1.bf16.msra.mxu0 0
        %1117 = vmatprep.subr.bf16.mxu0 0
        %1118 = vmatpush1.bf16.msra.mxu0 0
        %1119 = vmatprep.subr.bf16.mxu0 0
        %1120 = vmatpush1.bf16.msra.mxu0 0
        %1121 = vmatprep.subr.bf16.mxu0 0
        %1122 = vmatpush1.bf16.msra.mxu0 0
        %1123 = vmatprep.subr.bf16.mxu0 0
        %1124 = vmatpush1.bf16.msra.mxu0 0
        %1125 = vmatprep.subr.bf16.mxu0 0
        %1126 = vmatpush1.bf16.msra.mxu0 0
        %1127 = vmatprep.subr.bf16.mxu0 0
        %1128 = vmatpush1.bf16.msra.mxu0 0
        %1129 = vmatprep.subr.bf16.mxu0 0
        %1130 = vmatpush1.bf16.msra.mxu0 0
        %1131 = vmatprep.subr.bf16.mxu0 0
        %1132 = vmatpush1.bf16.msra.mxu0 0
        %1133 = vmatprep.subr.bf16.mxu0 0
        %1134 = vmatpush1.bf16.msra.mxu0 0
        %1135 = vmatprep.mubr.bf16.mxu0 0
        %1136 = vmatmul.mubr.bf16.gmra.mrb[0].mxu0 %v1101
        %v1137 = vpop.f32.mrb[0].mxu0
        %v1138 = vadd.f32 0.0, %v1137
        %v1139 = vpop.f32.mrb[0].mxu0
        %v1140 = vpop.f32.mrb[0].mxu0
        %v1141 = vadd.f32 0.0, %v1140
        %v1142 = vpop.f32.mrb[0].mxu0
        %1143 = vdwg.mxu0
        %v1144 = vadd.f32 %v1086, %v1138
        %v1145 = vadd.f32 %v1087, %v1141
        %v1146 = vrot.slane %v842, 1
        %v1147 = vrot.slane %v843, 1
        %v1148 = vsel %vm610, %v1146, %v1147
        %v1149 = vsel %vm610, %v1147, %v1146
        %v1150 = vsel %vm619, %v1148, 0.0
        %v1151 = vsel %vm620, %v1149, 0.0
        %v1152 = vpack.c.bf16 %v1151, %v1150
        %s1153 = scalar_lea.vmem [#allocation5], 104
        %v1154 = vld [vmem:[%s1153] sm:$0xf]
        %v1155 = vld [vmem:[%s1153 + $0x4] sm:$0xf]
        %v1158 = vunpack.c.l.b16 %v1154
        %v1159 = vunpack.c.l.b16 %v1155
        %v1160 = vpack.c.b16 %v1159, %v1158
        %v1163 = vsel %vm307, %v1152, 0
        %1165 = vmatprep.subr.bf16.mxu0 0
        %1166 = vmatpush1.bf16.msra.mxu0 %v1160
        %1167 = vmatprep.subr.bf16.mxu0 0
        %1168 = vmatpush1.bf16.msra.mxu0 0
        %1169 = vmatprep.subr.bf16.mxu0 0
        %1170 = vmatpush1.bf16.msra.mxu0 0
        %1171 = vmatprep.subr.bf16.mxu0 0
        %1172 = vmatpush1.bf16.msra.mxu0 0
        %1173 = vmatprep.subr.bf16.mxu0 0
        %1174 = vmatpush1.bf16.msra.mxu0 0
        %1175 = vmatprep.subr.bf16.mxu0 0
        %1176 = vmatpush1.bf16.msra.mxu0 0
        %1177 = vmatprep.subr.bf16.mxu0 0
        %1178 = vmatpush1.bf16.msra.mxu0 0
        %1179 = vmatprep.subr.bf16.mxu0 0
        %1180 = vmatpush1.bf16.msra.mxu0 0
        %1181 = vmatprep.subr.bf16.mxu0 0
        %1182 = vmatpush1.bf16.msra.mxu0 0
        %1183 = vmatprep.subr.bf16.mxu0 0
        %1184 = vmatpush1.bf16.msra.mxu0 0
        %1185 = vmatprep.subr.bf16.mxu0 0
        %1186 = vmatpush1.bf16.msra.mxu0 0
        %1187 = vmatprep.subr.bf16.mxu0 0
        %1188 = vmatpush1.bf16.msra.mxu0 0
        %1189 = vmatprep.subr.bf16.mxu0 0
        %1190 = vmatpush1.bf16.msra.mxu0 0
        %1191 = vmatprep.subr.bf16.mxu0 0
        %1192 = vmatpush1.bf16.msra.mxu0 0
        %1193 = vmatprep.subr.bf16.mxu0 0
        %1194 = vmatpush1.bf16.msra.mxu0 0
        %1195 = vmatprep.subr.bf16.mxu0 0
        %1196 = vmatpush1.bf16.msra.mxu0 0
        %1197 = vmatprep.mubr.bf16.mxu0 0
        %1198 = vmatmul.mubr.bf16.gmra.mrb[0].mxu0 %v1163
        %v1199 = vpop.f32.mrb[0].mxu0
        %v1200 = vadd.f32 0.0, %v1199
        %v1201 = vpop.f32.mrb[0].mxu0
        %v1202 = vpop.f32.mrb[0].mxu0
        %v1203 = vadd.f32 0.0, %v1202
        %v1204 = vpop.f32.mrb[0].mxu0
        %1205 = vdwg.mxu0
        %v1206 = vadd.f32 %v1144, %v1200
        %v1207 = vadd.f32 %v1145, %v1203
        %v1208 = vrot.slane %v842, 2
        %v1209 = vrot.slane %v843, 2
        %v1210 = vsel %vm681, %v1208, %v1209
        %v1211 = vsel %vm681, %v1209, %v1208
        %v1212 = vsel %vm690, %v1210, 0.0
        %v1213 = vsel %vm691, %v1211, 0.0
        %v1214 = vpack.c.bf16 %v1213, %v1212
        %s1215 = scalar_lea.vmem [#allocation5], 112
        %v1216 = vld [vmem:[%s1215] sm:$0xf]
        %v1217 = vld [vmem:[%s1215 + $0x4] sm:$0xf]
        %v1220 = vunpack.c.l.b16 %v1216
        %v1221 = vunpack.c.l.b16 %v1217
        %v1222 = vpack.c.b16 %v1221, %v1220
        %v1225 = vsel %vm307, %v1214, 0
        %1227 = vmatprep.subr.bf16.mxu0 0
        %1228 = vmatpush1.bf16.msra.mxu0 %v1222
        %1229 = vmatprep.subr.bf16.mxu0 0
        %1230 = vmatpush1.bf16.msra.mxu0 0
        %1231 = vmatprep.subr.bf16.mxu0 0
        %1232 = vmatpush1.bf16.msra.mxu0 0
        %1233 = vmatprep.subr.bf16.mxu0 0
        %1234 = vmatpush1.bf16.msra.mxu0 0
        %1235 = vmatprep.subr.bf16.mxu0 0
        %1236 = vmatpush1.bf16.msra.mxu0 0
        %1237 = vmatprep.subr.bf16.mxu0 0
        %1238 = vmatpush1.bf16.msra.mxu0 0
        %1239 = vmatprep.subr.bf16.mxu0 0
        %1240 = vmatpush1.bf16.msra.mxu0 0
        %1241 = vmatprep.subr.bf16.mxu0 0
        %1242 = vmatpush1.bf16.msra.mxu0 0
        %1243 = vmatprep.subr.bf16.mxu0 0
        %1244 = vmatpush1.bf16.msra.mxu0 0
        %1245 = vmatprep.subr.bf16.mxu0 0
        %1246 = vmatpush1.bf16.msra.mxu0 0
        %1247 = vmatprep.subr.bf16.mxu0 0
        %1248 = vmatpush1.bf16.msra.mxu0 0
        %1249 = vmatprep.subr.bf16.mxu0 0
        %1250 = vmatpush1.bf16.msra.mxu0 0
        %1251 = vmatprep.subr.bf16.mxu0 0
        %1252 = vmatpush1.bf16.msra.mxu0 0
        %1253 = vmatprep.subr.bf16.mxu0 0
        %1254 = vmatpush1.bf16.msra.mxu0 0
        %1255 = vmatprep.subr.bf16.mxu0 0
        %1256 = vmatpush1.bf16.msra.mxu0 0
        %1257 = vmatprep.subr.bf16.mxu0 0
        %1258 = vmatpush1.bf16.msra.mxu0 0
        %1259 = vmatprep.mubr.bf16.mxu0 0
        %1260 = vmatmul.mubr.bf16.gmra.mrb[0].mxu0 %v1225
        %v1261 = vpop.f32.mrb[0].mxu0
        %v1262 = vadd.f32 0.0, %v1261
        %v1263 = vpop.f32.mrb[0].mxu0
        %v1264 = vpop.f32.mrb[0].mxu0
        %v1265 = vadd.f32 0.0, %v1264
        %v1266 = vpop.f32.mrb[0].mxu0
        %1267 = vdwg.mxu0
        %v1268 = vadd.f32 %v1206, %v1262
        %v1269 = vadd.f32 %v1207, %v1265
        %v1270 = vrot.slane %v842, 3
        %v1271 = vrot.slane %v843, 3
        %v1272 = vsel %vm752, %v1270, %v1271
        %v1273 = vsel %vm752, %v1271, %v1270
        %v1274 = vsel %vm761, %v1272, 0.0
        %v1275 = vsel %vm762, %v1273, 0.0
        %v1276 = vpack.c.bf16 %v1275, %v1274
        %s1277 = scalar_lea.vmem [#allocation5], 120
        %v1278 = vld [vmem:[%s1277] sm:$0xf]
        %v1279 = vld [vmem:[%s1277 + $0x4] sm:$0xf]
        %v1282 = vunpack.c.l.b16 %v1278
        %v1283 = vunpack.c.l.b16 %v1279
        %v1284 = vpack.c.b16 %v1283, %v1282
        %v1287 = vsel %vm307, %v1276, 0
        %1289 = vmatprep.subr.bf16.mxu0 0
        %1290 = vmatpush1.bf16.msra.mxu0 %v1284
        %1291 = vmatprep.subr.bf16.mxu0 0
        %1292 = vmatpush1.bf16.msra.mxu0 0
        %1293 = vmatprep.subr.bf16.mxu0 0
        %1294 = vmatpush1.bf16.msra.mxu0 0
        %1295 = vmatprep.subr.bf16.mxu0 0
        %1296 = vmatpush1.bf16.msra.mxu0 0
        %1297 = vmatprep.subr.bf16.mxu0 0
        %1298 = vmatpush1.bf16.msra.mxu0 0
        %1299 = vmatprep.subr.bf16.mxu0 0
        %1300 = vmatpush1.bf16.msra.mxu0 0
        %1301 = vmatprep.subr.bf16.mxu0 0
        %1302 = vmatpush1.bf16.msra.mxu0 0
        %1303 = vmatprep.subr.bf16.mxu0 0
        %1304 = vmatpush1.bf16.msra.mxu0 0
        %1305 = vmatprep.subr.bf16.mxu0 0
        %1306 = vmatpush1.bf16.msra.mxu0 0
        %1307 = vmatprep.subr.bf16.mxu0 0
        %1308 = vmatpush1.bf16.msra.mxu0 0
        %1309 = vmatprep.subr.bf16.mxu0 0
        %1310 = vmatpush1.bf16.msra.mxu0 0
        %1311 = vmatprep.subr.bf16.mxu0 0
        %1312 = vmatpush1.bf16.msra.mxu0 0
        %1313 = vmatprep.subr.bf16.mxu0 0
        %1314 = vmatpush1.bf16.msra.mxu0 0
        %1315 = vmatprep.subr.bf16.mxu0 0
        %1316 = vmatpush1.bf16.msra.mxu0 0
        %1317 = vmatprep.subr.bf16.mxu0 0
        %1318 = vmatpush1.bf16.msra.mxu0 0
        %1319 = vmatprep.subr.bf16.mxu0 0
        %1320 = vmatpush1.bf16.msra.mxu0 0
        %1321 = vmatprep.mubr.bf16.mxu0 0
        %1322 = vmatmul.mubr.bf16.gmra.mrb[0].mxu0 %v1287
        %v1323 = vpop.f32.mrb[0].mxu0
        %v1324 = vadd.f32 0.0, %v1323
        %v1325 = vpop.f32.mrb[0].mxu0
        %v1326 = vpop.f32.mrb[0].mxu0
        %v1327 = vadd.f32 0.0, %v1326
        %v1328 = vpop.f32.mrb[0].mxu0
        %1329 = vdwg.mxu0
        %v1330 = vadd.f32 %v1268, %v1324
        %v1331 = vadd.f32 %v1269, %v1327
        %s1332 = scalar_lea.vmem %s2, 1
        %v1333 = vld [vmem:[%s1332] sm:$0x1]
        %v1335 = vlaneseq
        %v1336 = vshrl.u32 %v1335, 7
        %v1337 = vsub.s32 0, %v1336
        %v1338 = vrot.slane %v1333, %v1337
        %v1340 = vadd.f32 %v1330, %v1338
        %v1341 = vadd.f32 %v1331, %v1338
        %v1342 = vmul.f32 %v1340, 0.5
        %v1343 = vmul.f32 %v1341, 0.5
        %v1344 = vmul.f32 %v1340, %v832
        %v1345 = vmul.f32 %v1341, %v832
        %v1346 = verf.f32.pop %v1344
        %v1347 = verf.f32.pop %v1345
        %v1348 = vadd.f32 %v1346, 1.0
        %v1349 = vadd.f32 %v1347, 1.0
        %v1350 = vmul.f32 %v1342, %v1348
        %v1351 = vmul.f32 %v1343, %v1349
        %1354 = vrot.lane.b32.xlu0 %v842, 16
        %v1355 = vpop.permute.xlu0 %1354
        %1356 = vrot.lane.b32.xlu0 %v843, 16
        %v1357 = vpop.permute.xlu0 %1356
        %v1360 = vsel %vm307, %v262, %v1355
        %v1361 = vsel %vm307, %v263, %v1357
        %1364 = vrot.lane.b32.xlu0 %v1350, 16
        %v1365 = vpop.permute.xlu0 %1364
        %1366 = vrot.lane.b32.xlu0 %v1351, 16
        %v1367 = vpop.permute.xlu0 %1366
        %v1370 = vsel %vm307, %v839, %v1365
        %v1371 = vsel %vm307, %v840, %v1367
        %v1372 = vadd.f32 %v1360, %v1370
        %v1373 = vadd.f32 %v1361, %v1371
        %v1374 = vld [vmem:[%s3] sm:$0x1]
        %v1375 = vld [vmem:[%s4] sm:$0x1]
        %vm1376 = vcmask 261120
        %v1377 = vsel %vm1376, %v1372, 0.0
        %1378 = vadd.xlane.f32.xlu0 %v1377
        %v1379 = vpop.xlane.xlu0 %1378
        %v1380 = vsel %vm1376, %v1373, 0.0
        %1381 = vadd.xlane.f32.xlu0 %v1380
        %v1382 = vpop.xlane.xlu0 %1381
        %v1383 = vrcp.pop 32.0
        %v1384 = vmul.f32 %v1379, %v1383
        %v1385 = vmul.f32 %v1382, %v1383
        %v1386 = vsub.f32 %v1372, %v1384
        %v1387 = vsub.f32 %v1373, %v1385
        %v1388 = vmul.f32 %v1386, %v1386
        %v1389 = vmul.f32 %v1387, %v1387
        %v1390 = vsel %vm1376, %v1388, 0.0
        %1391 = vadd.xlane.f32.xlu0 %v1390
        %v1392 = vpop.xlane.xlu0 %1391
        %v1393 = vsel %vm1376, %v1389, 0.0
        %1394 = vadd.xlane.f32.xlu0 %v1393
        %v1395 = vpop.xlane.xlu0 %1394
        %v1396 = vmul.f32 %v1392, %v1383
        %v1397 = vmul.f32 %v1395, %v1383
        %v1398 = vadd.f32 %v1396, 1e-05
        %v1399 = vadd.f32 %v1397, 1e-05
        %v1400 = vrsqrt.pop %v1398
        %v1401 = vrsqrt.pop %v1399
        %v1402 = vmul.f32 %v1386, %v1400
        %v1403 = vmul.f32 %v1387, %v1401
        %v1405 = vlaneseq
        %v1406 = vshrl.u32 %v1405, 7
        %v1407 = vsub.s32 0, %v1406
        %v1408 = vrot.slane %v1374, %v1407
        %v1410 = vmul.f32 %v1402, %v1408
        %v1411 = vmul.f32 %v1403, %v1408
        %v1413 = vlaneseq
        %v1414 = vshrl.u32 %v1413, 7
        %v1415 = vsub.s32 0, %v1414
        %v1416 = vrot.slane %v1375, %v1415
        %v1418 = vadd.f32 %v1410, %v1416
        %v1419 = vadd.f32 %v1411, %v1416
        %1420 = vst.msk [vmem:[%s257] sm:$0xff] %vm1376, %v1418
        %1421 = vst.msk [vmem:[%s257 + $0x8] sm:$0xff] %vm1376, %v1419
        %s1422 = sand.u32 %s141, 1
        %s1423 = scalar_lea.sflag [#allocation4], %s1422
        %s1424 = sand.u32 %s141, 1
        %s1425 = smul.addr %s1424, 16
        %s1426 = scalar_lea.vmem [#allocation7], %s1425
        // Predicated region
        $region49: #{tpu_custom_call.1} parent=39 // pred_check
          %p1427 = pneg %p151
        $region50: #{tpu_custom_call.1} parent=39 // pred_check_branch
          %1429 = sbr.rel (%p1427) target = $region52
        $region51: #{tpu_custom_call.1} parent=39 // pred_region
          %s1431 = ssub.s32 256, 256
          %1432 = vsyncadd %s1423, %s1431
          %s1433 = smul.addr %s23, 2
          %s1434 = smul.addr %s1433, 128
          %s1435 = scalar_lea.hbm %s5, %s1434
          %s1436 = sshll.u32 %s1426, 4
          %s1437 = int_to_ptr.vmem [resolvable:$true] %s1436
          %1442 = dma.vmem_to_hbm [thread:$0]  %s1437, 256, %s1435, %s1423, 128, 128, 8
        $region52: #{tpu_custom_call.1} parent=39 // pred_fallthru
          _
      $region40: #{tpu_custom_call.1} parent=5 // pred_fallthru
        _
      %p1443 = scmp.le.s32.totalorder 2, %s18
      // Predicated region
      $region53: #{tpu_custom_call.1} parent=5 // pred_check
        %p1444 = pneg %p1443
      $region54: #{tpu_custom_call.1} parent=5 // pred_check_branch
        %1446 = sbr.rel (%p1444) target = $region56
      $region55: #{tpu_custom_call.1} parent=5 // pred_region
        %s1447 = ssub.s32 %s18, 2
        // Predicated region
        $region57: #{tpu_custom_call.1} parent=55 // pred_check
          %p1448 = pneg %p157
        $region58: #{tpu_custom_call.1} parent=55 // pred_check_branch
          %1450 = sbr.rel (%p1448) target = $region60
        $region59: #{tpu_custom_call.1} parent=55 // pred_region
          %s1451 = sand.u32 %s142, 1
          %s1452 = scalar_lea.sflag [#allocation4], %s1451
          %s1453 = sand.u32 %s142, 1
          %s1454 = smul.addr %s1453, 16
          %s1455 = scalar_lea.vmem [#allocation7], %s1454
          %1456 = dma.done %s1452, 256
        $region60: #{tpu_custom_call.1} parent=55 // pred_fallthru
          _
      $region56: #{tpu_custom_call.1} parent=5 // pred_fallthru
        _
    $region6: #{tpu_custom_call.1} parent=1 // loop_footer
      %s22 = sadd.s32 1, %s18
    $region7: #{tpu_custom_call.1} parent=1 // loop_footer_branch
      %17 = sbr.rel target = $region3
    $region8: #{tpu_custom_call.1} parent=1 // loop_exit
      _
    %1457 = vsyncpa [#allocation3], 1
    %s1458 = scalar_lea.sflag [#allocation3], 1
    %1459 = vsyncpa %s1458, 1
    %1460 = vsyncpa [#allocation6], 1
    %1461 = vsyncpa [#allocation4], 1
    %s1462 = scalar_lea.sflag [#allocation4], 1
    %1463 = vsyncpa %s1462, 1

</llo_original>
